<compile_context>
chip_gen: v5e
topology: v5e:2x2
jax: 0.10.0
libtpu: 0.0.40
codegen_flags: <defaults>
</compile_context>

<pallas_src>
import functools

import jax
import jax.numpy as jnp
from jax.experimental import pallas as pl
from jax.experimental.pallas import tpu as pltpu


# ------------------------- fused LSTM(+FC) kernel ----------------------------
def fused_lstm_fc_kernel(x_ref, wih0_ref, wihr_ref, whh_ref, b_ref,
                         h0_ref, c0_ref, fcw_ref, fcb_ref,
                         out_ref, h_n_ref, c_n_ref,
                         gx_sc, y_sc,
                         *, n_layers, seq_len, batch, hidden_dim):
    """All LSTM layers + FC head in one kernel (everything VMEM-resident).

    x_ref   : (T*B, E)        time-major flattened embeddings
    wih0_ref: (E, 4H)         layer-0 input->gates weights (transposed)
    wihr_ref: (max(L-1,1), H, 4H)   input->gates weights for layers 1..L-1
    whh_ref : (L, H, 4H)      hidden->gates weights (transposed)
    b_ref   : (L, 1, 4H)      b_ih + b_hh per layer
    h0/c0   : (L, B, H)       initial states
    fcw_ref : (H, O_pad)      FC weight, lane-padded to a multiple of 128
    fcb_ref : (1, O_pad)      FC bias, lane-padded
    out_ref : (B, O_pad)      FC output (lane-dense store; sliced outside)
    h_n/c_n : (L, B, H)       final states
    gx_sc   : (T*B, 4H) VMEM  hoisted input projections for the current layer
    y_sc    : (T*B, H)  VMEM  inter-layer activations (not written for last layer)
    """
    T, B, H = seq_len, batch, hidden_dim

    def project(inp_flat, w, bias):
        # One big (T*B, in) @ (in, 4H) matmul -- off the serial critical path.
        gx_sc[...] = jnp.dot(inp_flat, w,
                             preferred_element_type=jnp.float32) + bias

    def recurrence(layer, write_y):
        whh = whh_ref[layer]                 # (H, 4H): loaded once per layer
        h = h0_ref[layer]                    # (B, H)
        c = c0_ref[layer]                    # (B, H)
        # Fully unrolled time loop (T small & static).  For long T switch to
        # lax.fori_loop(0, T, step, (h, c), unroll=k) to bound code size.
        for t in range(T):
            row = t * B
            gates = (gx_sc[row:row + B, :]
                     + jnp.dot(h, whh, preferred_element_type=jnp.float32))
            # PyTorch LSTM gate order: i, f, g, o.
            i_g = jax.nn.sigmoid(gates[:, 0 * H:1 * H])
            f_g = jax.nn.sigmoid(gates[:, 1 * H:2 * H])
            g_g = jnp.tanh(gates[:, 2 * H:3 * H])
            o_g = jax.nn.sigmoid(gates[:, 3 * H:4 * H])
            c = f_g * c + i_g * g_g
            h = o_g * jnp.tanh(c)
            if write_y:                      # only if a later layer consumes it
                y_sc[row:row + B, :] = h
        h_n_ref[layer] = h                   # single store of the final state
        c_n_ref[layer] = c
        return h

    # Layer 0 (input = embeddings).
    project(x_ref[...], wih0_ref[...], b_ref[0])
    h_last = recurrence(0, write_y=(n_layers > 1))

    # Layers 1..L-1 (input = previous layer's VMEM-resident activations).
    # TODO(synk): training-mode inter-layer dropout mask (identity in eval).
    for l in range(1, n_layers):
        project(y_sc[...], wihr_ref[l - 1], b_ref[l])
        h_last = recurrence(l, write_y=(l < n_layers - 1))

    # Fused FC head on the last timestep only (nn.Dropout is identity in eval).
    out_ref[...] = (jnp.dot(h_last, fcw_ref[...],
                            preferred_element_type=jnp.float32) + fcb_ref[...])


def fused_lstm_fc(x_flat, wih0, wih_rest, whh_all, b_all, h0, c0,
                  fc_w_pad, fc_b_pad, *, seq_len, batch):
    TB, E = x_flat.shape
    L, B, H = h0.shape
    G = 4 * H
    O_pad = fc_w_pad.shape[-1]
    kernel = functools.partial(fused_lstm_fc_kernel, n_layers=L,
                               seq_len=seq_len, batch=batch, hidden_dim=H)
    return pl.pallas_call(
        kernel,
        out_shape=(jax.ShapeDtypeStruct((B, O_pad), jnp.float32),
                   jax.ShapeDtypeStruct((L, B, H), jnp.float32),
                   jax.ShapeDtypeStruct((L, B, H), jnp.float32)),
        grid=(1,),                                    # whole problem fits VMEM
        in_specs=[pl.BlockSpec((TB, E), lambda i: (0, 0)),
                  pl.BlockSpec(wih0.shape, lambda i: (0, 0)),
                  pl.BlockSpec(wih_rest.shape, lambda i: (0, 0, 0)),
                  pl.BlockSpec(whh_all.shape, lambda i: (0, 0, 0)),
                  pl.BlockSpec(b_all.shape, lambda i: (0, 0, 0)),
                  pl.BlockSpec((L, B, H), lambda i: (0, 0, 0)),
                  pl.BlockSpec((L, B, H), lambda i: (0, 0, 0)),
                  pl.BlockSpec(fc_w_pad.shape, lambda i: (0, 0)),
                  pl.BlockSpec(fc_b_pad.shape, lambda i: (0, 0))],
        out_specs=(pl.BlockSpec((B, O_pad), lambda i: (0, 0)),
                   pl.BlockSpec((L, B, H), lambda i: (0, 0, 0)),
                   pl.BlockSpec((L, B, H), lambda i: (0, 0, 0))),
        scratch_shapes=[pltpu.VMEM((TB, G), jnp.float32),   # gx_sc
                        pltpu.VMEM((TB, H), jnp.float32)],  # y_sc
        compiler_params=pltpu.CompilerParams(
            dimension_semantics=("arbitrary",),
            # Explicit VMEM budget (headroom-aware for v7x's 64 MiB physical
            # VMEM at production sizes; trivially satisfied here).
            vmem_limit_bytes=32 * 1024 * 1024),
    )(x_flat, wih0, wih_rest, whh_all, b_all, h0, c0, fc_w_pad, fc_b_pad)


# ------------------------------ Parameter init --------------------------------
def init_params(key, vocab_size, output_size, embed_dim, hidden_dim, n_layers):
    params = {}
    k_embed, k_lstm, k_fc = jax.random.split(key, 3)
    # nn.Embedding default: N(0, 1)
    params["embedding"] = jax.random.normal(
        k_embed, (vocab_size, embed_dim), jnp.float32)

    # nn.LSTM default: U(-1/sqrt(H), 1/sqrt(H)) for all weights/biases
    k = 1.0 / jnp.sqrt(jnp.float32(hidden_dim))
    lstm_keys = jax.random.split(k_lstm, n_layers * 4)
    for l in range(n_layers):
        in_dim = embed_dim if l == 0 else hidden_dim
        kw1, kw2, kb1, kb2 = lstm_keys[4 * l: 4 * l + 4]
        # stored transposed relative to PyTorch: (in_dim, 4H) / (H, 4H)
        params[f"wih_{l}"] = jax.random.uniform(
            kw1, (in_dim, 4 * hidden_dim), jnp.float32, -k, k)
        params[f"whh_{l}"] = jax.random.uniform(
            kw2, (hidden_dim, 4 * hidden_dim), jnp.float32, -k, k)
        b_ih = jax.random.uniform(kb1, (4 * hidden_dim,), jnp.float32, -k, k)
        b_hh = jax.random.uniform(kb2, (4 * hidden_dim,), jnp.float32, -k, k)
        params[f"b_{l}"] = (b_ih + b_hh).reshape(1, 4 * hidden_dim)

    # nn.Linear default: U(-1/sqrt(in), 1/sqrt(in))
    kf = 1.0 / jnp.sqrt(jnp.float32(hidden_dim))
    kw, kb = jax.random.split(k_fc)
    params["fc_w"] = jax.random.uniform(
        kw, (hidden_dim, output_size), jnp.float32, -kf, kf)
    params["fc_b"] = jax.random.uniform(
        kb, (1, output_size), jnp.float32, -kf, kf)
    return params


# ------------------------------- Forward pass ---------------------------------
def rnn_forward(params, tokens, hidden, *, n_layers):
    """Mirrors RNN.forward.  tokens: (B, T) int32; hidden: ((L,B,H), (L,B,H)).
    Returns (out, (h_n, c_n)) with out: (B, output_size)."""
    h0_all, c0_all = hidden
    B, T = tokens.shape
    H = h0_all.shape[-1]
    O = params["fc_w"].shape[-1]

    # Embedding gather: plain-JAX glue (table lookup, not a matmul hot path).
    embeds = jnp.take(params["embedding"], tokens, axis=0)          # (B, T, E)
    # Time-major, flattened so the layer-0 input projection inside the fused
    # kernel is one big (T*B, E) @ (E, 4H) matmul.
    x_flat = jnp.transpose(embeds, (1, 0, 2)).reshape(T * B, -1).astype(jnp.float32)

    wih0 = params["wih_0"]
    whh_all = jnp.stack([params[f"whh_{l}"] for l in range(n_layers)], axis=0)
    b_all = jnp.stack([params[f"b_{l}"] for l in range(n_layers)], axis=0)
    if n_layers > 1:
        wih_rest = jnp.stack(
            [params[f"wih_{l}"] for l in range(1, n_layers)], axis=0)
    else:
        wih_rest = jnp.zeros((1, H, 4 * H), jnp.float32)            # unused dummy

    # Lane-pad the FC head to 128 output lanes for a lane-dense store.
    O_pad = ((O + 127) // 128) * 128
    fc_w_pad = jnp.zeros((H, O_pad), jnp.float32).at[:, :O].set(params["fc_w"])
    fc_b_pad = jnp.zeros((1, O_pad), jnp.float32).at[:, :O].set(params["fc_b"])

    out_pad, h_n, c_n = fused_lstm_fc(
        x_flat, wih0, wih_rest, whh_all, b_all,
        h0_all.astype(jnp.float32), c0_all.astype(jnp.float32),
        fc_w_pad, fc_b_pad, seq_len=T, batch=B)
    return out_pad[:, :O], (h_n, c_n)


# --------------------------- Pure-JAX reference --------------------------------
def rnn_reference(params, tokens, hidden, *, n_layers):
    h0_all, c0_all = hidden
    H = h0_all.shape[-1]
    embeds = jnp.take(params["embedding"], tokens, axis=0)
    x = jnp.transpose(embeds, (1, 0, 2)).astype(jnp.float32)        # (T, B, E)
    T = x.shape[0]
    h_fin, c_fin = [], []
    inp = x
    for l in range(n_layers):
        wih, whh, b = params[f"wih_{l}"], params[f"whh_{l}"], params[f"b_{l}"]
        h, c = h0_all[l], c0_all[l]
        ys = []
        for t in range(T):
            gates = inp[t] @ wih + h @ whh + b
            i = jax.nn.sigmoid(gates[:, :H])
            f = jax.nn.sigmoid(gates[:, H:2 * H])
            g = jnp.tanh(gates[:, 2 * H:3 * H])
            o = jax.nn.sigmoid(gates[:, 3 * H:])
            c = f * c + i * g
            h = o * jnp.tanh(c)
            ys.append(h)
        inp = jnp.stack(ys, axis=0)
        h_fin.append(h)
        c_fin.append(c)
    out = inp[-1] @ params["fc_w"] + params["fc_b"]
    return out, (jnp.stack(h_fin, 0), jnp.stack(c_fin, 0))


# ---------------------------------- main ---------------------------------------
if __name__ == "__main__":
    vocab_size = 64
    output_size = 10
    embed_dim = 32
    hidden_dim = 32
    n_layers = 2
    batch = 2
    seq = 8

    key = jax.random.PRNGKey(0)
    k_params, k_tok = jax.random.split(key)

    params = init_params(k_params, vocab_size, output_size,
                         embed_dim, hidden_dim, n_layers)
    tokens = jax.random.randint(k_tok, (batch, seq), 0, vocab_size, jnp.int32)

    # init_hidden: zeros of shape (n_layers, batch, hidden_dim)
    hidden = (jnp.zeros((n_layers, batch, hidden_dim), jnp.float32),
              jnp.zeros((n_layers, batch, hidden_dim), jnp.float32))

    fwd = jax.jit(functools.partial(rnn_forward, n_layers=n_layers))
    out, (h_n, c_n) = fwd(params, tokens, hidden)
    jax.block_until_ready((out, h_n, c_n))

    assert out.shape == (batch, output_size)
    assert h_n.shape == (n_layers, batch, hidden_dim)
    assert c_n.shape == (n_layers, batch, hidden_dim)

    # Cross-check against a plain-JAX reference (loose tol covers TPU matmul
    # precision differences between MXU and XLA paths).
    out_ref, (h_ref, c_ref) = rnn_reference(params, tokens, hidden,
                                            n_layers=n_layers)
    assert jnp.allclose(out, out_ref, atol=5e-2, rtol=5e-2)
    assert jnp.allclose(h_n, h_ref, atol=5e-2, rtol=5e-2)
    assert jnp.allclose(c_n, c_ref, atol=5e-2, rtol=5e-2)

    print("KERNEL_OK")
</pallas_src>

<mosaic_0001>
module attributes {stable_mosaic.version = 11 : i64} {
  func.func @fused_lstm_fc_kernel(%arg0: i32, %arg1: memref<16x32xf32, #tpu.memory_space<vmem>>, %arg2: memref<32x128xf32, #tpu.memory_space<vmem>>, %arg3: memref<1x32x128xf32, #tpu.memory_space<vmem>>, %arg4: memref<2x32x128xf32, #tpu.memory_space<vmem>>, %arg5: memref<2x1x128xf32, #tpu.memory_space<vmem>>, %arg6: memref<2x2x32xf32, #tpu.memory_space<vmem>>, %arg7: memref<2x2x32xf32, #tpu.memory_space<vmem>>, %arg8: memref<32x128xf32, #tpu.memory_space<vmem>>, %arg9: memref<1x128xf32, #tpu.memory_space<vmem>>, %arg10: memref<2x128xf32, #tpu.memory_space<vmem>>, %arg11: memref<2x2x32xf32, #tpu.memory_space<vmem>>, %arg12: memref<2x2x32xf32, #tpu.memory_space<vmem>>, %arg13: memref<16x128xf32, #tpu.memory_space<vmem>>, %arg14: memref<16x32xf32, #tpu.memory_space<vmem>>) attributes {dimension_semantics = [#tpu.dimension_semantics<arbitrary>], iteration_bounds = array<i64: 1>, scalar_prefetch = 0 : i64, scratch_operands = 2 : i64, tpu.core_type = #tpu.core_type<tc>, window_params = [{pipeline_mode = #tpu.pipeline_mode<synchronous>, transform_indices = @transform_0, window_bounds = array<i64: 16, 32>}, {pipeline_mode = #tpu.pipeline_mode<synchronous>, transform_indices = @transform_1, window_bounds = array<i64: 32, 128>}, {pipeline_mode = #tpu.pipeline_mode<synchronous>, transform_indices = @transform_2, window_bounds = array<i64: 1, 32, 128>}, {pipeline_mode = #tpu.pipeline_mode<synchronous>, transform_indices = @transform_3, window_bounds = array<i64: 2, 32, 128>}, {pipeline_mode = #tpu.pipeline_mode<synchronous>, transform_indices = @transform_4, window_bounds = array<i64: 2, 1, 128>}, {pipeline_mode = #tpu.pipeline_mode<synchronous>, transform_indices = @transform_5, window_bounds = array<i64: 2, 2, 32>}, {pipeline_mode = #tpu.pipeline_mode<synchronous>, transform_indices = @transform_6, window_bounds = array<i64: 2, 2, 32>}, {pipeline_mode = #tpu.pipeline_mode<synchronous>, transform_indices = @transform_7, window_bounds = array<i64: 32, 128>}, {pipeline_mode = #tpu.pipeline_mode<synchronous>, transform_indices = @transform_8, window_bounds = array<i64: 1, 128>}, {pipeline_mode = #tpu.pipeline_mode<synchronous>, transform_indices = @transform_9, window_bounds = array<i64: 2, 128>}, {pipeline_mode = #tpu.pipeline_mode<synchronous>, transform_indices = @transform_10, window_bounds = array<i64: 2, 2, 32>}, {pipeline_mode = #tpu.pipeline_mode<synchronous>, transform_indices = @transform_11, window_bounds = array<i64: 2, 2, 32>}]} {
    %c0 = arith.constant 0 : index
    %c0_0 = arith.constant 0 : index
    %0 = vector.load %arg1[%c0, %c0_0] : memref<16x32xf32, #tpu.memory_space<vmem>>, vector<16x32xf32>
    %c0_1 = arith.constant 0 : index
    %c0_2 = arith.constant 0 : index
    %1 = vector.load %arg2[%c0_1, %c0_2] : memref<32x128xf32, #tpu.memory_space<vmem>>, vector<32x128xf32>
    %c0_3 = arith.constant 0 : index
    %c0_4 = arith.constant 0 : index
    %c0_5 = arith.constant 0 : index
    %2 = vector.load %arg5[%c0_3, %c0_4, %c0_5] : memref<2x1x128xf32, #tpu.memory_space<vmem>>, vector<1x1x128xf32>
    %3 = vector.shape_cast %2 : vector<1x1x128xf32> to vector<1x128xf32>
    %cst = arith.constant dense<0.000000e+00> : vector<16x128xf32>
    %4 = tpu.matmul %0, %1, %cst {dimension_numbers = #tpu.dot_dimension_numbers<[1], [0], [0], [1], [0, 0, 1, 1], [], []>} : vector<16x32xf32>, vector<32x128xf32>, vector<16x128xf32> -> vector<16x128xf32>
    %5 = vector.broadcast %3 : vector<1x128xf32> to vector<16x128xf32>
    %6 = arith.addf %4, %5 : vector<16x128xf32>
    %c0_6 = arith.constant 0 : index
    %c0_7 = arith.constant 0 : index
    %7 = vector.load %arg13[%c0_6, %c0_7] : memref<16x128xf32, #tpu.memory_space<vmem>>, vector<16x128xf32>
    tpu.vector_store %arg13[%c0_6, %c0_7], %6 {strides = array<i32>} : memref<16x128xf32, #tpu.memory_space<vmem>>, vector<16x128xf32>,
    %c0_8 = arith.constant 0 : index
    %c0_9 = arith.constant 0 : index
    %c0_10 = arith.constant 0 : index
    %8 = vector.load %arg4[%c0_8, %c0_9, %c0_10] : memref<2x32x128xf32, #tpu.memory_space<vmem>>, vector<1x32x128xf32>
    %9 = vector.shape_cast %8 : vector<1x32x128xf32> to vector<32x128xf32>
    %c0_11 = arith.constant 0 : index
    %c0_12 = arith.constant 0 : index
    %c0_13 = arith.constant 0 : index
    %10 = vector.load %arg6[%c0_11, %c0_12, %c0_13] : memref<2x2x32xf32, #tpu.memory_space<vmem>>, vector<1x2x32xf32>
    %11 = vector.shape_cast %10 : vector<1x2x32xf32> to vector<2x32xf32>
    %c0_14 = arith.constant 0 : index
    %c0_15 = arith.constant 0 : index
    %c0_16 = arith.constant 0 : index
    %12 = vector.load %arg7[%c0_14, %c0_15, %c0_16] : memref<2x2x32xf32, #tpu.memory_space<vmem>>, vector<1x2x32xf32>
    %13 = vector.shape_cast %12 : vector<1x2x32xf32> to vector<2x32xf32>
    %c0_17 = arith.constant 0 : index
    %c0_18 = arith.constant 0 : index
    %14 = vector.load %arg13[%c0_17, %c0_18] : memref<16x128xf32, #tpu.memory_space<vmem>>, vector<2x128xf32>
    %cst_19 = arith.constant dense<0.000000e+00> : vector<2x128xf32>
    %15 = tpu.matmul %11, %9, %cst_19 {dimension_numbers = #tpu.dot_dimension_numbers<[1], [0], [0], [1], [0, 0, 1, 1], [], []>} : vector<2x32xf32>, vector<32x128xf32>, vector<2x128xf32> -> vector<2x128xf32>
    %16 = arith.addf %14, %15 : vector<2x128xf32>
    %17 = vector.extract_strided_slice %16 {offsets = [0, 0], sizes = [2, 32], strides = [1, 1]} : vector<2x128xf32> to vector<2x32xf32>
    %18 = arith.negf %17 : vector<2x32xf32>
    %19 = math.exp %18 : vector<2x32xf32>
    %cst_20 = arith.constant 1.000000e+00 : f32
    %20 = vector.broadcast %cst_20 : f32 to vector<2x32xf32>
    %21 = arith.addf %20, %19 : vector<2x32xf32>
    %22 = arith.divf %20, %21 : vector<2x32xf32>
    %23 = vector.extract_strided_slice %16 {offsets = [0, 32], sizes = [2, 32], strides = [1, 1]} : vector<2x128xf32> to vector<2x32xf32>
    %24 = arith.negf %23 : vector<2x32xf32>
    %25 = math.exp %24 : vector<2x32xf32>
    %cst_21 = arith.constant 1.000000e+00 : f32
    %26 = vector.broadcast %cst_21 : f32 to vector<2x32xf32>
    %27 = arith.addf %26, %25 : vector<2x32xf32>
    %28 = arith.divf %26, %27 : vector<2x32xf32>
    %29 = vector.extract_strided_slice %16 {offsets = [0, 64], sizes = [2, 32], strides = [1, 1]} : vector<2x128xf32> to vector<2x32xf32>
    %30 = math.tanh %29 : vector<2x32xf32>
    %31 = vector.extract_strided_slice %16 {offsets = [0, 96], sizes = [2, 32], strides = [1, 1]} : vector<2x128xf32> to vector<2x32xf32>
    %32 = arith.negf %31 : vector<2x32xf32>
    %33 = math.exp %32 : vector<2x32xf32>
    %cst_22 = arith.constant 1.000000e+00 : f32
    %34 = vector.broadcast %cst_22 : f32 to vector<2x32xf32>
    %35 = arith.addf %34, %33 : vector<2x32xf32>
    %36 = arith.divf %34, %35 : vector<2x32xf32>
    %37 = arith.mulf %28, %13 : vector<2x32xf32>
    %38 = arith.mulf %22, %30 : vector<2x32xf32>
    %39 = arith.addf %37, %38 : vector<2x32xf32>
    %40 = math.tanh %39 : vector<2x32xf32>
    %41 = arith.mulf %36, %40 : vector<2x32xf32>
    %c0_23 = arith.constant 0 : index
    %c0_24 = arith.constant 0 : index
    %42 = vector.load %arg14[%c0_23, %c0_24] : memref<16x32xf32, #tpu.memory_space<vmem>>, vector<2x32xf32>
    tpu.vector_store %arg14[%c0_23, %c0_24], %41 {strides = array<i32>} : memref<16x32xf32, #tpu.memory_space<vmem>>, vector<2x32xf32>,
    %c2 = arith.constant 2 : index
    %c0_25 = arith.constant 0 : index
    %43 = vector.load %arg13[%c2, %c0_25] : memref<16x128xf32, #tpu.memory_space<vmem>>, vector<2x128xf32>
    %cst_26 = arith.constant dense<0.000000e+00> : vector<2x128xf32>
    %44 = tpu.matmul %41, %9, %cst_26 {dimension_numbers = #tpu.dot_dimension_numbers<[1], [0], [0], [1], [0, 0, 1, 1], [], []>} : vector<2x32xf32>, vector<32x128xf32>, vector<2x128xf32> -> vector<2x128xf32>
    %45 = arith.addf %43, %44 : vector<2x128xf32>
    %46 = vector.extract_strided_slice %45 {offsets = [0, 0], sizes = [2, 32], strides = [1, 1]} : vector<2x128xf32> to vector<2x32xf32>
    %47 = arith.negf %46 : vector<2x32xf32>
    %48 = math.exp %47 : vector<2x32xf32>
    %cst_27 = arith.constant 1.000000e+00 : f32
    %49 = vector.broadcast %cst_27 : f32 to vector<2x32xf32>
    %50 = arith.addf %49, %48 : vector<2x32xf32>
    %51 = arith.divf %49, %50 : vector<2x32xf32>
    %52 = vector.extract_strided_slice %45 {offsets = [0, 32], sizes = [2, 32], strides = [1, 1]} : vector<2x128xf32> to vector<2x32xf32>
    %53 = arith.negf %52 : vector<2x32xf32>
    %54 = math.exp %53 : vector<2x32xf32>
    %cst_28 = arith.constant 1.000000e+00 : f32
    %55 = vector.broadcast %cst_28 : f32 to vector<2x32xf32>
    %56 = arith.addf %55, %54 : vector<2x32xf32>
    %57 = arith.divf %55, %56 : vector<2x32xf32>
    %58 = vector.extract_strided_slice %45 {offsets = [0, 64], sizes = [2, 32], strides = [1, 1]} : vector<2x128xf32> to vector<2x32xf32>
    %59 = math.tanh %58 : vector<2x32xf32>
    %60 = vector.extract_strided_slice %45 {offsets = [0, 96], sizes = [2, 32], strides = [1, 1]} : vector<2x128xf32> to vector<2x32xf32>
    %61 = arith.negf %60 : vector<2x32xf32>
    %62 = math.exp %61 : vector<2x32xf32>
    %cst_29 = arith.constant 1.000000e+00 : f32
    %63 = vector.broadcast %cst_29 : f32 to vector<2x32xf32>
    %64 = arith.addf %63, %62 : vector<2x32xf32>
    %65 = arith.divf %63, %64 : vector<2x32xf32>
    %66 = arith.mulf %57, %39 : vector<2x32xf32>
    %67 = arith.mulf %51, %59 : vector<2x32xf32>
    %68 = arith.addf %66, %67 : vector<2x32xf32>
    %69 = math.tanh %68 : vector<2x32xf32>
    %70 = arith.mulf %65, %69 : vector<2x32xf32>
    %c2_30 = arith.constant 2 : index
    %c0_31 = arith.constant 0 : index
    %71 = vector.load %arg14[%c2_30, %c0_31] : memref<16x32xf32, #tpu.memory_space<vmem>>, vector<2x32xf32>
    tpu.vector_store %arg14[%c2_30, %c0_31], %70 {strides = array<i32>} : memref<16x32xf32, #tpu.memory_space<vmem>>, vector<2x32xf32>,
    %c4 = arith.constant 4 : index
    %c0_32 = arith.constant 0 : index
    %72 = vector.load %arg13[%c4, %c0_32] : memref<16x128xf32, #tpu.memory_space<vmem>>, vector<2x128xf32>
    %cst_33 = arith.constant dense<0.000000e+00> : vector<2x128xf32>
    %73 = tpu.matmul %70, %9, %cst_33 {dimension_numbers = #tpu.dot_dimension_numbers<[1], [0], [0], [1], [0, 0, 1, 1], [], []>} : vector<2x32xf32>, vector<32x128xf32>, vector<2x128xf32> -> vector<2x128xf32>
    %74 = arith.addf %72, %73 : vector<2x128xf32>
    %75 = vector.extract_strided_slice %74 {offsets = [0, 0], sizes = [2, 32], strides = [1, 1]} : vector<2x128xf32> to vector<2x32xf32>
    %76 = arith.negf %75 : vector<2x32xf32>
    %77 = math.exp %76 : vector<2x32xf32>
    %cst_34 = arith.constant 1.000000e+00 : f32
    %78 = vector.broadcast %cst_34 : f32 to vector<2x32xf32>
    %79 = arith.addf %78, %77 : vector<2x32xf32>
    %80 = arith.divf %78, %79 : vector<2x32xf32>
    %81 = vector.extract_strided_slice %74 {offsets = [0, 32], sizes = [2, 32], strides = [1, 1]} : vector<2x128xf32> to vector<2x32xf32>
    %82 = arith.negf %81 : vector<2x32xf32>
    %83 = math.exp %82 : vector<2x32xf32>
    %cst_35 = arith.constant 1.000000e+00 : f32
    %84 = vector.broadcast %cst_35 : f32 to vector<2x32xf32>
    %85 = arith.addf %84, %83 : vector<2x32xf32>
    %86 = arith.divf %84, %85 : vector<2x32xf32>
    %87 = vector.extract_strided_slice %74 {offsets = [0, 64], sizes = [2, 32], strides = [1, 1]} : vector<2x128xf32> to vector<2x32xf32>
    %88 = math.tanh %87 : vector<2x32xf32>
    %89 = vector.extract_strided_slice %74 {offsets = [0, 96], sizes = [2, 32], strides = [1, 1]} : vector<2x128xf32> to vector<2x32xf32>
    %90 = arith.negf %89 : vector<2x32xf32>
    %91 = math.exp %90 : vector<2x32xf32>
    %cst_36 = arith.constant 1.000000e+00 : f32
    %92 = vector.broadcast %cst_36 : f32 to vector<2x32xf32>
    %93 = arith.addf %92, %91 : vector<2x32xf32>
    %94 = arith.divf %92, %93 : vector<2x32xf32>
    %95 = arith.mulf %86, %68 : vector<2x32xf32>
    %96 = arith.mulf %80, %88 : vector<2x32xf32>
    %97 = arith.addf %95, %96 : vector<2x32xf32>
    %98 = math.tanh %97 : vector<2x32xf32>
    %99 = arith.mulf %94, %98 : vector<2x32xf32>
    %c4_37 = arith.constant 4 : index
    %c0_38 = arith.constant 0 : index
    %100 = vector.load %arg14[%c4_37, %c0_38] : memref<16x32xf32, #tpu.memory_space<vmem>>, vector<2x32xf32>
    tpu.vector_store %arg14[%c4_37, %c0_38], %99 {strides = array<i32>} : memref<16x32xf32, #tpu.memory_space<vmem>>, vector<2x32xf32>,
    %c6 = arith.constant 6 : index
    %c0_39 = arith.constant 0 : index
    %101 = vector.load %arg13[%c6, %c0_39] : memref<16x128xf32, #tpu.memory_space<vmem>>, vector<2x128xf32>
    %cst_40 = arith.constant dense<0.000000e+00> : vector<2x128xf32>
    %102 = tpu.matmul %99, %9, %cst_40 {dimension_numbers = #tpu.dot_dimension_numbers<[1], [0], [0], [1], [0, 0, 1, 1], [], []>} : vector<2x32xf32>, vector<32x128xf32>, vector<2x128xf32> -> vector<2x128xf32>
    %103 = arith.addf %101, %102 : vector<2x128xf32>
    %104 = vector.extract_strided_slice %103 {offsets = [0, 0], sizes = [2, 32], strides = [1, 1]} : vector<2x128xf32> to vector<2x32xf32>
    %105 = arith.negf %104 : vector<2x32xf32>
    %106 = math.exp %105 : vector<2x32xf32>
    %cst_41 = arith.constant 1.000000e+00 : f32
    %107 = vector.broadcast %cst_41 : f32 to vector<2x32xf32>
    %108 = arith.addf %107, %106 : vector<2x32xf32>
    %109 = arith.divf %107, %108 : vector<2x32xf32>
    %110 = vector.extract_strided_slice %103 {offsets = [0, 32], sizes = [2, 32], strides = [1, 1]} : vector<2x128xf32> to vector<2x32xf32>
    %111 = arith.negf %110 : vector<2x32xf32>
    %112 = math.exp %111 : vector<2x32xf32>
    %cst_42 = arith.constant 1.000000e+00 : f32
    %113 = vector.broadcast %cst_42 : f32 to vector<2x32xf32>
    %114 = arith.addf %113, %112 : vector<2x32xf32>
    %115 = arith.divf %113, %114 : vector<2x32xf32>
    %116 = vector.extract_strided_slice %103 {offsets = [0, 64], sizes = [2, 32], strides = [1, 1]} : vector<2x128xf32> to vector<2x32xf32>
    %117 = math.tanh %116 : vector<2x32xf32>
    %118 = vector.extract_strided_slice %103 {offsets = [0, 96], sizes = [2, 32], strides = [1, 1]} : vector<2x128xf32> to vector<2x32xf32>
    %119 = arith.negf %118 : vector<2x32xf32>
    %120 = math.exp %119 : vector<2x32xf32>
    %cst_43 = arith.constant 1.000000e+00 : f32
    %121 = vector.broadcast %cst_43 : f32 to vector<2x32xf32>
    %122 = arith.addf %121, %120 : vector<2x32xf32>
    %123 = arith.divf %121, %122 : vector<2x32xf32>
    %124 = arith.mulf %115, %97 : vector<2x32xf32>
    %125 = arith.mulf %109, %117 : vector<2x32xf32>
    %126 = arith.addf %124, %125 : vector<2x32xf32>
    %127 = math.tanh %126 : vector<2x32xf32>
    %128 = arith.mulf %123, %127 : vector<2x32xf32>
    %c6_44 = arith.constant 6 : index
    %c0_45 = arith.constant 0 : index
    %129 = vector.load %arg14[%c6_44, %c0_45] : memref<16x32xf32, #tpu.memory_space<vmem>>, vector<2x32xf32>
    tpu.vector_store %arg14[%c6_44, %c0_45], %128 {strides = array<i32>} : memref<16x32xf32, #tpu.memory_space<vmem>>, vector<2x32xf32>,
    %c8 = arith.constant 8 : index
    %c0_46 = arith.constant 0 : index
    %130 = vector.load %arg13[%c8, %c0_46] : memref<16x128xf32, #tpu.memory_space<vmem>>, vector<2x128xf32>
    %cst_47 = arith.constant dense<0.000000e+00> : vector<2x128xf32>
    %131 = tpu.matmul %128, %9, %cst_47 {dimension_numbers = #tpu.dot_dimension_numbers<[1], [0], [0], [1], [0, 0, 1, 1], [], []>} : vector<2x32xf32>, vector<32x128xf32>, vector<2x128xf32> -> vector<2x128xf32>
    %132 = arith.addf %130, %131 : vector<2x128xf32>
    %133 = vector.extract_strided_slice %132 {offsets = [0, 0], sizes = [2, 32], strides = [1, 1]} : vector<2x128xf32> to vector<2x32xf32>
    %134 = arith.negf %133 : vector<2x32xf32>
    %135 = math.exp %134 : vector<2x32xf32>
    %cst_48 = arith.constant 1.000000e+00 : f32
    %136 = vector.broadcast %cst_48 : f32 to vector<2x32xf32>
    %137 = arith.addf %136, %135 : vector<2x32xf32>
    %138 = arith.divf %136, %137 : vector<2x32xf32>
    %139 = vector.extract_strided_slice %132 {offsets = [0, 32], sizes = [2, 32], strides = [1, 1]} : vector<2x128xf32> to vector<2x32xf32>
    %140 = arith.negf %139 : vector<2x32xf32>
    %141 = math.exp %140 : vector<2x32xf32>
    %cst_49 = arith.constant 1.000000e+00 : f32
    %142 = vector.broadcast %cst_49 : f32 to vector<2x32xf32>
    %143 = arith.addf %142, %141 : vector<2x32xf32>
    %144 = arith.divf %142, %143 : vector<2x32xf32>
    %145 = vector.extract_strided_slice %132 {offsets = [0, 64], sizes = [2, 32], strides = [1, 1]} : vector<2x128xf32> to vector<2x32xf32>
    %146 = math.tanh %145 : vector<2x32xf32>
    %147 = vector.extract_strided_slice %132 {offsets = [0, 96], sizes = [2, 32], strides = [1, 1]} : vector<2x128xf32> to vector<2x32xf32>
    %148 = arith.negf %147 : vector<2x32xf32>
    %149 = math.exp %148 : vector<2x32xf32>
    %cst_50 = arith.constant 1.000000e+00 : f32
    %150 = vector.broadcast %cst_50 : f32 to vector<2x32xf32>
    %151 = arith.addf %150, %149 : vector<2x32xf32>
    %152 = arith.divf %150, %151 : vector<2x32xf32>
    %153 = arith.mulf %144, %126 : vector<2x32xf32>
    %154 = arith.mulf %138, %146 : vector<2x32xf32>
    %155 = arith.addf %153, %154 : vector<2x32xf32>
    %156 = math.tanh %155 : vector<2x32xf32>
    %157 = arith.mulf %152, %156 : vector<2x32xf32>
    %c8_51 = arith.constant 8 : index
    %c0_52 = arith.constant 0 : index
    %158 = vector.load %arg14[%c8_51, %c0_52] : memref<16x32xf32, #tpu.memory_space<vmem>>, vector<2x32xf32>
    tpu.vector_store %arg14[%c8_51, %c0_52], %157 {strides = array<i32>} : memref<16x32xf32, #tpu.memory_space<vmem>>, vector<2x32xf32>,
    %c10 = arith.constant 10 : index
    %c0_53 = arith.constant 0 : index
    %159 = vector.load %arg13[%c10, %c0_53] : memref<16x128xf32, #tpu.memory_space<vmem>>, vector<2x128xf32>
    %cst_54 = arith.constant dense<0.000000e+00> : vector<2x128xf32>
    %160 = tpu.matmul %157, %9, %cst_54 {dimension_numbers = #tpu.dot_dimension_numbers<[1], [0], [0], [1], [0, 0, 1, 1], [], []>} : vector<2x32xf32>, vector<32x128xf32>, vector<2x128xf32> -> vector<2x128xf32>
    %161 = arith.addf %159, %160 : vector<2x128xf32>
    %162 = vector.extract_strided_slice %161 {offsets = [0, 0], sizes = [2, 32], strides = [1, 1]} : vector<2x128xf32> to vector<2x32xf32>
    %163 = arith.negf %162 : vector<2x32xf32>
    %164 = math.exp %163 : vector<2x32xf32>
    %cst_55 = arith.constant 1.000000e+00 : f32
    %165 = vector.broadcast %cst_55 : f32 to vector<2x32xf32>
    %166 = arith.addf %165, %164 : vector<2x32xf32>
    %167 = arith.divf %165, %166 : vector<2x32xf32>
    %168 = vector.extract_strided_slice %161 {offsets = [0, 32], sizes = [2, 32], strides = [1, 1]} : vector<2x128xf32> to vector<2x32xf32>
    %169 = arith.negf %168 : vector<2x32xf32>
    %170 = math.exp %169 : vector<2x32xf32>
    %cst_56 = arith.constant 1.000000e+00 : f32
    %171 = vector.broadcast %cst_56 : f32 to vector<2x32xf32>
    %172 = arith.addf %171, %170 : vector<2x32xf32>
    %173 = arith.divf %171, %172 : vector<2x32xf32>
    %174 = vector.extract_strided_slice %161 {offsets = [0, 64], sizes = [2, 32], strides = [1, 1]} : vector<2x128xf32> to vector<2x32xf32>
    %175 = math.tanh %174 : vector<2x32xf32>
    %176 = vector.extract_strided_slice %161 {offsets = [0, 96], sizes = [2, 32], strides = [1, 1]} : vector<2x128xf32> to vector<2x32xf32>
    %177 = arith.negf %176 : vector<2x32xf32>
    %178 = math.exp %177 : vector<2x32xf32>
    %cst_57 = arith.constant 1.000000e+00 : f32
    %179 = vector.broadcast %cst_57 : f32 to vector<2x32xf32>
    %180 = arith.addf %179, %178 : vector<2x32xf32>
    %181 = arith.divf %179, %180 : vector<2x32xf32>
    %182 = arith.mulf %173, %155 : vector<2x32xf32>
    %183 = arith.mulf %167, %175 : vector<2x32xf32>
    %184 = arith.addf %182, %183 : vector<2x32xf32>
    %185 = math.tanh %184 : vector<2x32xf32>
    %186 = arith.mulf %181, %185 : vector<2x32xf32>
    %c10_58 = arith.constant 10 : index
    %c0_59 = arith.constant 0 : index
    %187 = vector.load %arg14[%c10_58, %c0_59] : memref<16x32xf32, #tpu.memory_space<vmem>>, vector<2x32xf32>
    tpu.vector_store %arg14[%c10_58, %c0_59], %186 {strides = array<i32>} : memref<16x32xf32, #tpu.memory_space<vmem>>, vector<2x32xf32>,
    %c12 = arith.constant 12 : index
    %c0_60 = arith.constant 0 : index
    %188 = vector.load %arg13[%c12, %c0_60] : memref<16x128xf32, #tpu.memory_space<vmem>>, vector<2x128xf32>
    %cst_61 = arith.constant dense<0.000000e+00> : vector<2x128xf32>
    %189 = tpu.matmul %186, %9, %cst_61 {dimension_numbers = #tpu.dot_dimension_numbers<[1], [0], [0], [1], [0, 0, 1, 1], [], []>} : vector<2x32xf32>, vector<32x128xf32>, vector<2x128xf32> -> vector<2x128xf32>
    %190 = arith.addf %188, %189 : vector<2x128xf32>
    %191 = vector.extract_strided_slice %190 {offsets = [0, 0], sizes = [2, 32], strides = [1, 1]} : vector<2x128xf32> to vector<2x32xf32>
    %192 = arith.negf %191 : vector<2x32xf32>
    %193 = math.exp %192 : vector<2x32xf32>
    %cst_62 = arith.constant 1.000000e+00 : f32
    %194 = vector.broadcast %cst_62 : f32 to vector<2x32xf32>
    %195 = arith.addf %194, %193 : vector<2x32xf32>
    %196 = arith.divf %194, %195 : vector<2x32xf32>
    %197 = vector.extract_strided_slice %190 {offsets = [0, 32], sizes = [2, 32], strides = [1, 1]} : vector<2x128xf32> to vector<2x32xf32>
    %198 = arith.negf %197 : vector<2x32xf32>
    %199 = math.exp %198 : vector<2x32xf32>
    %cst_63 = arith.constant 1.000000e+00 : f32
    %200 = vector.broadcast %cst_63 : f32 to vector<2x32xf32>
    %201 = arith.addf %200, %199 : vector<2x32xf32>
    %202 = arith.divf %200, %201 : vector<2x32xf32>
    %203 = vector.extract_strided_slice %190 {offsets = [0, 64], sizes = [2, 32], strides = [1, 1]} : vector<2x128xf32> to vector<2x32xf32>
    %204 = math.tanh %203 : vector<2x32xf32>
    %205 = vector.extract_strided_slice %190 {offsets = [0, 96], sizes = [2, 32], strides = [1, 1]} : vector<2x128xf32> to vector<2x32xf32>
    %206 = arith.negf %205 : vector<2x32xf32>
    %207 = math.exp %206 : vector<2x32xf32>
    %cst_64 = arith.constant 1.000000e+00 : f32
    %208 = vector.broadcast %cst_64 : f32 to vector<2x32xf32>
    %209 = arith.addf %208, %207 : vector<2x32xf32>
    %210 = arith.divf %208, %209 : vector<2x32xf32>
    %211 = arith.mulf %202, %184 : vector<2x32xf32>
    %212 = arith.mulf %196, %204 : vector<2x32xf32>
    %213 = arith.addf %211, %212 : vector<2x32xf32>
    %214 = math.tanh %213 : vector<2x32xf32>
    %215 = arith.mulf %210, %214 : vector<2x32xf32>
    %c12_65 = arith.constant 12 : index
    %c0_66 = arith.constant 0 : index
    %216 = vector.load %arg14[%c12_65, %c0_66] : memref<16x32xf32, #tpu.memory_space<vmem>>, vector<2x32xf32>
    tpu.vector_store %arg14[%c12_65, %c0_66], %215 {strides = array<i32>} : memref<16x32xf32, #tpu.memory_space<vmem>>, vector<2x32xf32>,
    %c14 = arith.constant 14 : index
    %c0_67 = arith.constant 0 : index
    %217 = vector.load %arg13[%c14, %c0_67] : memref<16x128xf32, #tpu.memory_space<vmem>>, vector<2x128xf32>
    %cst_68 = arith.constant dense<0.000000e+00> : vector<2x128xf32>
    %218 = tpu.matmul %215, %9, %cst_68 {dimension_numbers = #tpu.dot_dimension_numbers<[1], [0], [0], [1], [0, 0, 1, 1], [], []>} : vector<2x32xf32>, vector<32x128xf32>, vector<2x128xf32> -> vector<2x128xf32>
    %219 = arith.addf %217, %218 : vector<2x128xf32>
    %220 = vector.extract_strided_slice %219 {offsets = [0, 0], sizes = [2, 32], strides = [1, 1]} : vector<2x128xf32> to vector<2x32xf32>
    %221 = arith.negf %220 : vector<2x32xf32>
    %222 = math.exp %221 : vector<2x32xf32>
    %cst_69 = arith.constant 1.000000e+00 : f32
    %223 = vector.broadcast %cst_69 : f32 to vector<2x32xf32>
    %224 = arith.addf %223, %222 : vector<2x32xf32>
    %225 = arith.divf %223, %224 : vector<2x32xf32>
    %226 = vector.extract_strided_slice %219 {offsets = [0, 32], sizes = [2, 32], strides = [1, 1]} : vector<2x128xf32> to vector<2x32xf32>
    %227 = arith.negf %226 : vector<2x32xf32>
    %228 = math.exp %227 : vector<2x32xf32>
    %cst_70 = arith.constant 1.000000e+00 : f32
    %229 = vector.broadcast %cst_70 : f32 to vector<2x32xf32>
    %230 = arith.addf %229, %228 : vector<2x32xf32>
    %231 = arith.divf %229, %230 : vector<2x32xf32>
    %232 = vector.extract_strided_slice %219 {offsets = [0, 64], sizes = [2, 32], strides = [1, 1]} : vector<2x128xf32> to vector<2x32xf32>
    %233 = math.tanh %232 : vector<2x32xf32>
    %234 = vector.extract_strided_slice %219 {offsets = [0, 96], sizes = [2, 32], strides = [1, 1]} : vector<2x128xf32> to vector<2x32xf32>
    %235 = arith.negf %234 : vector<2x32xf32>
    %236 = math.exp %235 : vector<2x32xf32>
    %cst_71 = arith.constant 1.000000e+00 : f32
    %237 = vector.broadcast %cst_71 : f32 to vector<2x32xf32>
    %238 = arith.addf %237, %236 : vector<2x32xf32>
    %239 = arith.divf %237, %238 : vector<2x32xf32>
    %240 = arith.mulf %231, %213 : vector<2x32xf32>
    %241 = arith.mulf %225, %233 : vector<2x32xf32>
    %242 = arith.addf %240, %241 : vector<2x32xf32>
    %243 = math.tanh %242 : vector<2x32xf32>
    %244 = arith.mulf %239, %243 : vector<2x32xf32>
    %c14_72 = arith.constant 14 : index
    %c0_73 = arith.constant 0 : index
    %245 = vector.load %arg14[%c14_72, %c0_73] : memref<16x32xf32, #tpu.memory_space<vmem>>, vector<2x32xf32>
    tpu.vector_store %arg14[%c14_72, %c0_73], %244 {strides = array<i32>} : memref<16x32xf32, #tpu.memory_space<vmem>>, vector<2x32xf32>,
    %c0_74 = arith.constant 0 : index
    %c0_75 = arith.constant 0 : index
    %c0_76 = arith.constant 0 : index
    %246 = vector.load %arg11[%c0_74, %c0_75, %c0_76] : memref<2x2x32xf32, #tpu.memory_space<vmem>>, vector<1x2x32xf32>
    %247 = vector.shape_cast %246 : vector<1x2x32xf32> to vector<2x32xf32>
    %248 = vector.shape_cast %244 : vector<2x32xf32> to vector<1x2x32xf32>
    tpu.vector_store %arg11[%c0_74, %c0_75, %c0_76], %248 {strides = array<i32>} : memref<2x2x32xf32, #tpu.memory_space<vmem>>, vector<1x2x32xf32>,
    %c0_77 = arith.constant 0 : index
    %c0_78 = arith.constant 0 : index
    %c0_79 = arith.constant 0 : index
    %249 = vector.load %arg12[%c0_77, %c0_78, %c0_79] : memref<2x2x32xf32, #tpu.memory_space<vmem>>, vector<1x2x32xf32>
    %250 = vector.shape_cast %249 : vector<1x2x32xf32> to vector<2x32xf32>
    %251 = vector.shape_cast %242 : vector<2x32xf32> to vector<1x2x32xf32>
    tpu.vector_store %arg12[%c0_77, %c0_78, %c0_79], %251 {strides = array<i32>} : memref<2x2x32xf32, #tpu.memory_space<vmem>>, vector<1x2x32xf32>,
    %c0_80 = arith.constant 0 : index
    %c0_81 = arith.constant 0 : index
    %252 = vector.load %arg14[%c0_80, %c0_81] : memref<16x32xf32, #tpu.memory_space<vmem>>, vector<16x32xf32>
    %c0_82 = arith.constant 0 : index
    %c0_83 = arith.constant 0 : index
    %c0_84 = arith.constant 0 : index
    %253 = vector.load %arg3[%c0_82, %c0_83, %c0_84] : memref<1x32x128xf32, #tpu.memory_space<vmem>>, vector<1x32x128xf32>
    %254 = vector.shape_cast %253 : vector<1x32x128xf32> to vector<32x128xf32>
    %c1 = arith.constant 1 : index
    %c0_85 = arith.constant 0 : index
    %c0_86 = arith.constant 0 : index
    %255 = vector.load %arg5[%c1, %c0_85, %c0_86] : memref<2x1x128xf32, #tpu.memory_space<vmem>>, vector<1x1x128xf32>
    %256 = vector.shape_cast %255 : vector<1x1x128xf32> to vector<1x128xf32>
    %cst_87 = arith.constant dense<0.000000e+00> : vector<16x128xf32>
    %257 = tpu.matmul %252, %254, %cst_87 {dimension_numbers = #tpu.dot_dimension_numbers<[1], [0], [0], [1], [0, 0, 1, 1], [], []>} : vector<16x32xf32>, vector<32x128xf32>, vector<16x128xf32> -> vector<16x128xf32>
    %258 = vector.broadcast %256 : vector<1x128xf32> to vector<16x128xf32>
    %259 = arith.addf %257, %258 : vector<16x128xf32>
    %c0_88 = arith.constant 0 : index
    %c0_89 = arith.constant 0 : index
    %260 = vector.load %arg13[%c0_88, %c0_89] : memref<16x128xf32, #tpu.memory_space<vmem>>, vector<16x128xf32>
    tpu.vector_store %arg13[%c0_88, %c0_89], %259 {strides = array<i32>} : memref<16x128xf32, #tpu.memory_space<vmem>>, vector<16x128xf32>,
    %c1_90 = arith.constant 1 : index
    %c0_91 = arith.constant 0 : index
    %c0_92 = arith.constant 0 : index
    %261 = vector.load %arg4[%c1_90, %c0_91, %c0_92] : memref<2x32x128xf32, #tpu.memory_space<vmem>>, vector<1x32x128xf32>
    %262 = vector.shape_cast %261 : vector<1x32x128xf32> to vector<32x128xf32>
    %c1_93 = arith.constant 1 : index
    %c0_94 = arith.constant 0 : index
    %c0_95 = arith.constant 0 : index
    %263 = vector.load %arg6[%c1_93, %c0_94, %c0_95] : memref<2x2x32xf32, #tpu.memory_space<vmem>>, vector<1x2x32xf32>
    %264 = vector.shape_cast %263 : vector<1x2x32xf32> to vector<2x32xf32>
    %c1_96 = arith.constant 1 : index
    %c0_97 = arith.constant 0 : index
    %c0_98 = arith.constant 0 : index
    %265 = vector.load %arg7[%c1_96, %c0_97, %c0_98] : memref<2x2x32xf32, #tpu.memory_space<vmem>>, vector<1x2x32xf32>
    %266 = vector.shape_cast %265 : vector<1x2x32xf32> to vector<2x32xf32>
    %c0_99 = arith.constant 0 : index
    %c0_100 = arith.constant 0 : index
    %267 = vector.load %arg13[%c0_99, %c0_100] : memref<16x128xf32, #tpu.memory_space<vmem>>, vector<2x128xf32>
    %cst_101 = arith.constant dense<0.000000e+00> : vector<2x128xf32>
    %268 = tpu.matmul %264, %262, %cst_101 {dimension_numbers = #tpu.dot_dimension_numbers<[1], [0], [0], [1], [0, 0, 1, 1], [], []>} : vector<2x32xf32>, vector<32x128xf32>, vector<2x128xf32> -> vector<2x128xf32>
    %269 = arith.addf %267, %268 : vector<2x128xf32>
    %270 = vector.extract_strided_slice %269 {offsets = [0, 0], sizes = [2, 32], strides = [1, 1]} : vector<2x128xf32> to vector<2x32xf32>
    %271 = arith.negf %270 : vector<2x32xf32>
    %272 = math.exp %271 : vector<2x32xf32>
    %cst_102 = arith.constant 1.000000e+00 : f32
    %273 = vector.broadcast %cst_102 : f32 to vector<2x32xf32>
    %274 = arith.addf %273, %272 : vector<2x32xf32>
    %275 = arith.divf %273, %274 : vector<2x32xf32>
    %276 = vector.extract_strided_slice %269 {offsets = [0, 32], sizes = [2, 32], strides = [1, 1]} : vector<2x128xf32> to vector<2x32xf32>
    %277 = arith.negf %276 : vector<2x32xf32>
    %278 = math.exp %277 : vector<2x32xf32>
    %cst_103 = arith.constant 1.000000e+00 : f32
    %279 = vector.broadcast %cst_103 : f32 to vector<2x32xf32>
    %280 = arith.addf %279, %278 : vector<2x32xf32>
    %281 = arith.divf %279, %280 : vector<2x32xf32>
    %282 = vector.extract_strided_slice %269 {offsets = [0, 64], sizes = [2, 32], strides = [1, 1]} : vector<2x128xf32> to vector<2x32xf32>
    %283 = math.tanh %282 : vector<2x32xf32>
    %284 = vector.extract_strided_slice %269 {offsets = [0, 96], sizes = [2, 32], strides = [1, 1]} : vector<2x128xf32> to vector<2x32xf32>
    %285 = arith.negf %284 : vector<2x32xf32>
    %286 = math.exp %285 : vector<2x32xf32>
    %cst_104 = arith.constant 1.000000e+00 : f32
    %287 = vector.broadcast %cst_104 : f32 to vector<2x32xf32>
    %288 = arith.addf %287, %286 : vector<2x32xf32>
    %289 = arith.divf %287, %288 : vector<2x32xf32>
    %290 = arith.mulf %281, %266 : vector<2x32xf32>
    %291 = arith.mulf %275, %283 : vector<2x32xf32>
    %292 = arith.addf %290, %291 : vector<2x32xf32>
    %293 = math.tanh %292 : vector<2x32xf32>
    %294 = arith.mulf %289, %293 : vector<2x32xf32>
    %c2_105 = arith.constant 2 : index
    %c0_106 = arith.constant 0 : index
    %295 = vector.load %arg13[%c2_105, %c0_106] : memref<16x128xf32, #tpu.memory_space<vmem>>, vector<2x128xf32>
    %cst_107 = arith.constant dense<0.000000e+00> : vector<2x128xf32>
    %296 = tpu.matmul %294, %262, %cst_107 {dimension_numbers = #tpu.dot_dimension_numbers<[1], [0], [0], [1], [0, 0, 1, 1], [], []>} : vector<2x32xf32>, vector<32x128xf32>, vector<2x128xf32> -> vector<2x128xf32>
    %297 = arith.addf %295, %296 : vector<2x128xf32>
    %298 = vector.extract_strided_slice %297 {offsets = [0, 0], sizes = [2, 32], strides = [1, 1]} : vector<2x128xf32> to vector<2x32xf32>
    %299 = arith.negf %298 : vector<2x32xf32>
    %300 = math.exp %299 : vector<2x32xf32>
    %cst_108 = arith.constant 1.000000e+00 : f32
    %301 = vector.broadcast %cst_108 : f32 to vector<2x32xf32>
    %302 = arith.addf %301, %300 : vector<2x32xf32>
    %303 = arith.divf %301, %302 : vector<2x32xf32>
    %304 = vector.extract_strided_slice %297 {offsets = [0, 32], sizes = [2, 32], strides = [1, 1]} : vector<2x128xf32> to vector<2x32xf32>
    %305 = arith.negf %304 : vector<2x32xf32>
    %306 = math.exp %305 : vector<2x32xf32>
    %cst_109 = arith.constant 1.000000e+00 : f32
    %307 = vector.broadcast %cst_109 : f32 to vector<2x32xf32>
    %308 = arith.addf %307, %306 : vector<2x32xf32>
    %309 = arith.divf %307, %308 : vector<2x32xf32>
    %310 = vector.extract_strided_slice %297 {offsets = [0, 64], sizes = [2, 32], strides = [1, 1]} : vector<2x128xf32> to vector<2x32xf32>
    %311 = math.tanh %310 : vector<2x32xf32>
    %312 = vector.extract_strided_slice %297 {offsets = [0, 96], sizes = [2, 32], strides = [1, 1]} : vector<2x128xf32> to vector<2x32xf32>
    %313 = arith.negf %312 : vector<2x32xf32>
    %314 = math.exp %313 : vector<2x32xf32>
    %cst_110 = arith.constant 1.000000e+00 : f32
    %315 = vector.broadcast %cst_110 : f32 to vector<2x32xf32>
    %316 = arith.addf %315, %314 : vector<2x32xf32>
    %317 = arith.divf %315, %316 : vector<2x32xf32>
    %318 = arith.mulf %309, %292 : vector<2x32xf32>
    %319 = arith.mulf %303, %311 : vector<2x32xf32>
    %320 = arith.addf %318, %319 : vector<2x32xf32>
    %321 = math.tanh %320 : vector<2x32xf32>
    %322 = arith.mulf %317, %321 : vector<2x32xf32>
    %c4_111 = arith.constant 4 : index
    %c0_112 = arith.constant 0 : index
    %323 = vector.load %arg13[%c4_111, %c0_112] : memref<16x128xf32, #tpu.memory_space<vmem>>, vector<2x128xf32>
    %cst_113 = arith.constant dense<0.000000e+00> : vector<2x128xf32>
    %324 = tpu.matmul %322, %262, %cst_113 {dimension_numbers = #tpu.dot_dimension_numbers<[1], [0], [0], [1], [0, 0, 1, 1], [], []>} : vector<2x32xf32>, vector<32x128xf32>, vector<2x128xf32> -> vector<2x128xf32>
    %325 = arith.addf %323, %324 : vector<2x128xf32>
    %326 = vector.extract_strided_slice %325 {offsets = [0, 0], sizes = [2, 32], strides = [1, 1]} : vector<2x128xf32> to vector<2x32xf32>
    %327 = arith.negf %326 : vector<2x32xf32>
    %328 = math.exp %327 : vector<2x32xf32>
    %cst_114 = arith.constant 1.000000e+00 : f32
    %329 = vector.broadcast %cst_114 : f32 to vector<2x32xf32>
    %330 = arith.addf %329, %328 : vector<2x32xf32>
    %331 = arith.divf %329, %330 : vector<2x32xf32>
    %332 = vector.extract_strided_slice %325 {offsets = [0, 32], sizes = [2, 32], strides = [1, 1]} : vector<2x128xf32> to vector<2x32xf32>
    %333 = arith.negf %332 : vector<2x32xf32>
    %334 = math.exp %333 : vector<2x32xf32>
    %cst_115 = arith.constant 1.000000e+00 : f32
    %335 = vector.broadcast %cst_115 : f32 to vector<2x32xf32>
    %336 = arith.addf %335, %334 : vector<2x32xf32>
    %337 = arith.divf %335, %336 : vector<2x32xf32>
    %338 = vector.extract_strided_slice %325 {offsets = [0, 64], sizes = [2, 32], strides = [1, 1]} : vector<2x128xf32> to vector<2x32xf32>
    %339 = math.tanh %338 : vector<2x32xf32>
    %340 = vector.extract_strided_slice %325 {offsets = [0, 96], sizes = [2, 32], strides = [1, 1]} : vector<2x128xf32> to vector<2x32xf32>
    %341 = arith.negf %340 : vector<2x32xf32>
    %342 = math.exp %341 : vector<2x32xf32>
    %cst_116 = arith.constant 1.000000e+00 : f32
    %343 = vector.broadcast %cst_116 : f32 to vector<2x32xf32>
    %344 = arith.addf %343, %342 : vector<2x32xf32>
    %345 = arith.divf %343, %344 : vector<2x32xf32>
    %346 = arith.mulf %337, %320 : vector<2x32xf32>
    %347 = arith.mulf %331, %339 : vector<2x32xf32>
    %348 = arith.addf %346, %347 : vector<2x32xf32>
    %349 = math.tanh %348 : vector<2x32xf32>
    %350 = arith.mulf %345, %349 : vector<2x32xf32>
    %c6_117 = arith.constant 6 : index
    %c0_118 = arith.constant 0 : index
    %351 = vector.load %arg13[%c6_117, %c0_118] : memref<16x128xf32, #tpu.memory_space<vmem>>, vector<2x128xf32>
    %cst_119 = arith.constant dense<0.000000e+00> : vector<2x128xf32>
    %352 = tpu.matmul %350, %262, %cst_119 {dimension_numbers = #tpu.dot_dimension_numbers<[1], [0], [0], [1], [0, 0, 1, 1], [], []>} : vector<2x32xf32>, vector<32x128xf32>, vector<2x128xf32> -> vector<2x128xf32>
    %353 = arith.addf %351, %352 : vector<2x128xf32>
    %354 = vector.extract_strided_slice %353 {offsets = [0, 0], sizes = [2, 32], strides = [1, 1]} : vector<2x128xf32> to vector<2x32xf32>
    %355 = arith.negf %354 : vector<2x32xf32>
    %356 = math.exp %355 : vector<2x32xf32>
    %cst_120 = arith.constant 1.000000e+00 : f32
    %357 = vector.broadcast %cst_120 : f32 to vector<2x32xf32>
    %358 = arith.addf %357, %356 : vector<2x32xf32>
    %359 = arith.divf %357, %358 : vector<2x32xf32>
    %360 = vector.extract_strided_slice %353 {offsets = [0, 32], sizes = [2, 32], strides = [1, 1]} : vector<2x128xf32> to vector<2x32xf32>
    %361 = arith.negf %360 : vector<2x32xf32>
    %362 = math.exp %361 : vector<2x32xf32>
    %cst_121 = arith.constant 1.000000e+00 : f32
    %363 = vector.broadcast %cst_121 : f32 to vector<2x32xf32>
    %364 = arith.addf %363, %362 : vector<2x32xf32>
    %365 = arith.divf %363, %364 : vector<2x32xf32>
    %366 = vector.extract_strided_slice %353 {offsets = [0, 64], sizes = [2, 32], strides = [1, 1]} : vector<2x128xf32> to vector<2x32xf32>
    %367 = math.tanh %366 : vector<2x32xf32>
    %368 = vector.extract_strided_slice %353 {offsets = [0, 96], sizes = [2, 32], strides = [1, 1]} : vector<2x128xf32> to vector<2x32xf32>
    %369 = arith.negf %368 : vector<2x32xf32>
    %370 = math.exp %369 : vector<2x32xf32>
    %cst_122 = arith.constant 1.000000e+00 : f32
    %371 = vector.broadcast %cst_122 : f32 to vector<2x32xf32>
    %372 = arith.addf %371, %370 : vector<2x32xf32>
    %373 = arith.divf %371, %372 : vector<2x32xf32>
    %374 = arith.mulf %365, %348 : vector<2x32xf32>
    %375 = arith.mulf %359, %367 : vector<2x32xf32>
    %376 = arith.addf %374, %375 : vector<2x32xf32>
    %377 = math.tanh %376 : vector<2x32xf32>
    %378 = arith.mulf %373, %377 : vector<2x32xf32>
    %c8_123 = arith.constant 8 : index
    %c0_124 = arith.constant 0 : index
    %379 = vector.load %arg13[%c8_123, %c0_124] : memref<16x128xf32, #tpu.memory_space<vmem>>, vector<2x128xf32>
    %cst_125 = arith.constant dense<0.000000e+00> : vector<2x128xf32>
    %380 = tpu.matmul %378, %262, %cst_125 {dimension_numbers = #tpu.dot_dimension_numbers<[1], [0], [0], [1], [0, 0, 1, 1], [], []>} : vector<2x32xf32>, vector<32x128xf32>, vector<2x128xf32> -> vector<2x128xf32>
    %381 = arith.addf %379, %380 : vector<2x128xf32>
    %382 = vector.extract_strided_slice %381 {offsets = [0, 0], sizes = [2, 32], strides = [1, 1]} : vector<2x128xf32> to vector<2x32xf32>
    %383 = arith.negf %382 : vector<2x32xf32>
    %384 = math.exp %383 : vector<2x32xf32>
    %cst_126 = arith.constant 1.000000e+00 : f32
    %385 = vector.broadcast %cst_126 : f32 to vector<2x32xf32>
    %386 = arith.addf %385, %384 : vector<2x32xf32>
    %387 = arith.divf %385, %386 : vector<2x32xf32>
    %388 = vector.extract_strided_slice %381 {offsets = [0, 32], sizes = [2, 32], strides = [1, 1]} : vector<2x128xf32> to vector<2x32xf32>
    %389 = arith.negf %388 : vector<2x32xf32>
    %390 = math.exp %389 : vector<2x32xf32>
    %cst_127 = arith.constant 1.000000e+00 : f32
    %391 = vector.broadcast %cst_127 : f32 to vector<2x32xf32>
    %392 = arith.addf %391, %390 : vector<2x32xf32>
    %393 = arith.divf %391, %392 : vector<2x32xf32>
    %394 = vector.extract_strided_slice %381 {offsets = [0, 64], sizes = [2, 32], strides = [1, 1]} : vector<2x128xf32> to vector<2x32xf32>
    %395 = math.tanh %394 : vector<2x32xf32>
    %396 = vector.extract_strided_slice %381 {offsets = [0, 96], sizes = [2, 32], strides = [1, 1]} : vector<2x128xf32> to vector<2x32xf32>
    %397 = arith.negf %396 : vector<2x32xf32>
    %398 = math.exp %397 : vector<2x32xf32>
    %cst_128 = arith.constant 1.000000e+00 : f32
    %399 = vector.broadcast %cst_128 : f32 to vector<2x32xf32>
    %400 = arith.addf %399, %398 : vector<2x32xf32>
    %401 = arith.divf %399, %400 : vector<2x32xf32>
    %402 = arith.mulf %393, %376 : vector<2x32xf32>
    %403 = arith.mulf %387, %395 : vector<2x32xf32>
    %404 = arith.addf %402, %403 : vector<2x32xf32>
    %405 = math.tanh %404 : vector<2x32xf32>
    %406 = arith.mulf %401, %405 : vector<2x32xf32>
    %c10_129 = arith.constant 10 : index
    %c0_130 = arith.constant 0 : index
    %407 = vector.load %arg13[%c10_129, %c0_130] : memref<16x128xf32, #tpu.memory_space<vmem>>, vector<2x128xf32>
    %cst_131 = arith.constant dense<0.000000e+00> : vector<2x128xf32>
    %408 = tpu.matmul %406, %262, %cst_131 {dimension_numbers = #tpu.dot_dimension_numbers<[1], [0], [0], [1], [0, 0, 1, 1], [], []>} : vector<2x32xf32>, vector<32x128xf32>, vector<2x128xf32> -> vector<2x128xf32>
    %409 = arith.addf %407, %408 : vector<2x128xf32>
    %410 = vector.extract_strided_slice %409 {offsets = [0, 0], sizes = [2, 32], strides = [1, 1]} : vector<2x128xf32> to vector<2x32xf32>
    %411 = arith.negf %410 : vector<2x32xf32>
    %412 = math.exp %411 : vector<2x32xf32>
    %cst_132 = arith.constant 1.000000e+00 : f32
    %413 = vector.broadcast %cst_132 : f32 to vector<2x32xf32>
    %414 = arith.addf %413, %412 : vector<2x32xf32>
    %415 = arith.divf %413, %414 : vector<2x32xf32>
    %416 = vector.extract_strided_slice %409 {offsets = [0, 32], sizes = [2, 32], strides = [1, 1]} : vector<2x128xf32> to vector<2x32xf32>
    %417 = arith.negf %416 : vector<2x32xf32>
    %418 = math.exp %417 : vector<2x32xf32>
    %cst_133 = arith.constant 1.000000e+00 : f32
    %419 = vector.broadcast %cst_133 : f32 to vector<2x32xf32>
    %420 = arith.addf %419, %418 : vector<2x32xf32>
    %421 = arith.divf %419, %420 : vector<2x32xf32>
    %422 = vector.extract_strided_slice %409 {offsets = [0, 64], sizes = [2, 32], strides = [1, 1]} : vector<2x128xf32> to vector<2x32xf32>
    %423 = math.tanh %422 : vector<2x32xf32>
    %424 = vector.extract_strided_slice %409 {offsets = [0, 96], sizes = [2, 32], strides = [1, 1]} : vector<2x128xf32> to vector<2x32xf32>
    %425 = arith.negf %424 : vector<2x32xf32>
    %426 = math.exp %425 : vector<2x32xf32>
    %cst_134 = arith.constant 1.000000e+00 : f32
    %427 = vector.broadcast %cst_134 : f32 to vector<2x32xf32>
    %428 = arith.addf %427, %426 : vector<2x32xf32>
    %429 = arith.divf %427, %428 : vector<2x32xf32>
    %430 = arith.mulf %421, %404 : vector<2x32xf32>
    %431 = arith.mulf %415, %423 : vector<2x32xf32>
    %432 = arith.addf %430, %431 : vector<2x32xf32>
    %433 = math.tanh %432 : vector<2x32xf32>
    %434 = arith.mulf %429, %433 : vector<2x32xf32>
    %c12_135 = arith.constant 12 : index
    %c0_136 = arith.constant 0 : index
    %435 = vector.load %arg13[%c12_135, %c0_136] : memref<16x128xf32, #tpu.memory_space<vmem>>, vector<2x128xf32>
    %cst_137 = arith.constant dense<0.000000e+00> : vector<2x128xf32>
    %436 = tpu.matmul %434, %262, %cst_137 {dimension_numbers = #tpu.dot_dimension_numbers<[1], [0], [0], [1], [0, 0, 1, 1], [], []>} : vector<2x32xf32>, vector<32x128xf32>, vector<2x128xf32> -> vector<2x128xf32>
    %437 = arith.addf %435, %436 : vector<2x128xf32>
    %438 = vector.extract_strided_slice %437 {offsets = [0, 0], sizes = [2, 32], strides = [1, 1]} : vector<2x128xf32> to vector<2x32xf32>
    %439 = arith.negf %438 : vector<2x32xf32>
    %440 = math.exp %439 : vector<2x32xf32>
    %cst_138 = arith.constant 1.000000e+00 : f32
    %441 = vector.broadcast %cst_138 : f32 to vector<2x32xf32>
    %442 = arith.addf %441, %440 : vector<2x32xf32>
    %443 = arith.divf %441, %442 : vector<2x32xf32>
    %444 = vector.extract_strided_slice %437 {offsets = [0, 32], sizes = [2, 32], strides = [1, 1]} : vector<2x128xf32> to vector<2x32xf32>
    %445 = arith.negf %444 : vector<2x32xf32>
    %446 = math.exp %445 : vector<2x32xf32>
    %cst_139 = arith.constant 1.000000e+00 : f32
    %447 = vector.broadcast %cst_139 : f32 to vector<2x32xf32>
    %448 = arith.addf %447, %446 : vector<2x32xf32>
    %449 = arith.divf %447, %448 : vector<2x32xf32>
    %450 = vector.extract_strided_slice %437 {offsets = [0, 64], sizes = [2, 32], strides = [1, 1]} : vector<2x128xf32> to vector<2x32xf32>
    %451 = math.tanh %450 : vector<2x32xf32>
    %452 = vector.extract_strided_slice %437 {offsets = [0, 96], sizes = [2, 32], strides = [1, 1]} : vector<2x128xf32> to vector<2x32xf32>
    %453 = arith.negf %452 : vector<2x32xf32>
    %454 = math.exp %453 : vector<2x32xf32>
    %cst_140 = arith.constant 1.000000e+00 : f32
    %455 = vector.broadcast %cst_140 : f32 to vector<2x32xf32>
    %456 = arith.addf %455, %454 : vector<2x32xf32>
    %457 = arith.divf %455, %456 : vector<2x32xf32>
    %458 = arith.mulf %449, %432 : vector<2x32xf32>
    %459 = arith.mulf %443, %451 : vector<2x32xf32>
    %460 = arith.addf %458, %459 : vector<2x32xf32>
    %461 = math.tanh %460 : vector<2x32xf32>
    %462 = arith.mulf %457, %461 : vector<2x32xf32>
    %c14_141 = arith.constant 14 : index
    %c0_142 = arith.constant 0 : index
    %463 = vector.load %arg13[%c14_141, %c0_142] : memref<16x128xf32, #tpu.memory_space<vmem>>, vector<2x128xf32>
    %cst_143 = arith.constant dense<0.000000e+00> : vector<2x128xf32>
    %464 = tpu.matmul %462, %262, %cst_143 {dimension_numbers = #tpu.dot_dimension_numbers<[1], [0], [0], [1], [0, 0, 1, 1], [], []>} : vector<2x32xf32>, vector<32x128xf32>, vector<2x128xf32> -> vector<2x128xf32>
    %465 = arith.addf %463, %464 : vector<2x128xf32>
    %466 = vector.extract_strided_slice %465 {offsets = [0, 0], sizes = [2, 32], strides = [1, 1]} : vector<2x128xf32> to vector<2x32xf32>
    %467 = arith.negf %466 : vector<2x32xf32>
    %468 = math.exp %467 : vector<2x32xf32>
    %cst_144 = arith.constant 1.000000e+00 : f32
    %469 = vector.broadcast %cst_144 : f32 to vector<2x32xf32>
    %470 = arith.addf %469, %468 : vector<2x32xf32>
    %471 = arith.divf %469, %470 : vector<2x32xf32>
    %472 = vector.extract_strided_slice %465 {offsets = [0, 32], sizes = [2, 32], strides = [1, 1]} : vector<2x128xf32> to vector<2x32xf32>
    %473 = arith.negf %472 : vector<2x32xf32>
    %474 = math.exp %473 : vector<2x32xf32>
    %cst_145 = arith.constant 1.000000e+00 : f32
    %475 = vector.broadcast %cst_145 : f32 to vector<2x32xf32>
    %476 = arith.addf %475, %474 : vector<2x32xf32>
    %477 = arith.divf %475, %476 : vector<2x32xf32>
    %478 = vector.extract_strided_slice %465 {offsets = [0, 64], sizes = [2, 32], strides = [1, 1]} : vector<2x128xf32> to vector<2x32xf32>
    %479 = math.tanh %478 : vector<2x32xf32>
    %480 = vector.extract_strided_slice %465 {offsets = [0, 96], sizes = [2, 32], strides = [1, 1]} : vector<2x128xf32> to vector<2x32xf32>
    %481 = arith.negf %480 : vector<2x32xf32>
    %482 = math.exp %481 : vector<2x32xf32>
    %cst_146 = arith.constant 1.000000e+00 : f32
    %483 = vector.broadcast %cst_146 : f32 to vector<2x32xf32>
    %484 = arith.addf %483, %482 : vector<2x32xf32>
    %485 = arith.divf %483, %484 : vector<2x32xf32>
    %486 = arith.mulf %477, %460 : vector<2x32xf32>
    %487 = arith.mulf %471, %479 : vector<2x32xf32>
    %488 = arith.addf %486, %487 : vector<2x32xf32>
    %489 = math.tanh %488 : vector<2x32xf32>
    %490 = arith.mulf %485, %489 : vector<2x32xf32>
    %c1_147 = arith.constant 1 : index
    %c0_148 = arith.constant 0 : index
    %c0_149 = arith.constant 0 : index
    %491 = vector.load %arg11[%c1_147, %c0_148, %c0_149] : memref<2x2x32xf32, #tpu.memory_space<vmem>>, vector<1x2x32xf32>
    %492 = vector.shape_cast %491 : vector<1x2x32xf32> to vector<2x32xf32>
    %493 = vector.shape_cast %490 : vector<2x32xf32> to vector<1x2x32xf32>
    tpu.vector_store %arg11[%c1_147, %c0_148, %c0_149], %493 {strides = array<i32>} : memref<2x2x32xf32, #tpu.memory_space<vmem>>, vector<1x2x32xf32>,
    %c1_150 = arith.constant 1 : index
    %c0_151 = arith.constant 0 : index
    %c0_152 = arith.constant 0 : index
    %494 = vector.load %arg12[%c1_150, %c0_151, %c0_152] : memref<2x2x32xf32, #tpu.memory_space<vmem>>, vector<1x2x32xf32>
    %495 = vector.shape_cast %494 : vector<1x2x32xf32> to vector<2x32xf32>
    %496 = vector.shape_cast %488 : vector<2x32xf32> to vector<1x2x32xf32>
    tpu.vector_store %arg12[%c1_150, %c0_151, %c0_152], %496 {strides = array<i32>} : memref<2x2x32xf32, #tpu.memory_space<vmem>>, vector<1x2x32xf32>,
    %c0_153 = arith.constant 0 : index
    %c0_154 = arith.constant 0 : index
    %497 = vector.load %arg8[%c0_153, %c0_154] : memref<32x128xf32, #tpu.memory_space<vmem>>, vector<32x128xf32>
    %cst_155 = arith.constant dense<0.000000e+00> : vector<2x128xf32>
    %498 = tpu.matmul %490, %497, %cst_155 {dimension_numbers = #tpu.dot_dimension_numbers<[1], [0], [0], [1], [0, 0, 1, 1], [], []>} : vector<2x32xf32>, vector<32x128xf32>, vector<2x128xf32> -> vector<2x128xf32>
    %c0_156 = arith.constant 0 : index
    %c0_157 = arith.constant 0 : index
    %499 = vector.load %arg9[%c0_156, %c0_157] : memref<1x128xf32, #tpu.memory_space<vmem>>, vector<1x128xf32>
    %500 = vector.broadcast %499 : vector<1x128xf32> to vector<2x128xf32>
    %501 = arith.addf %498, %500 : vector<2x128xf32>
    %c0_158 = arith.constant 0 : index
    %c0_159 = arith.constant 0 : index
    %502 = vector.load %arg10[%c0_158, %c0_159] : memref<2x128xf32, #tpu.memory_space<vmem>>, vector<2x128xf32>
    tpu.vector_store %arg10[%c0_158, %c0_159], %501 {strides = array<i32>} : memref<2x128xf32, #tpu.memory_space<vmem>>, vector<2x128xf32>,
    return
  }
  func.func @transform_0(%arg0: i32) -> (i32, i32) {
    %c0_i32 = arith.constant 0 : i32
    %c0_i32_0 = arith.constant 0 : i32
    %c0_i32_1 = arith.constant 0 : i32
    return %c0_i32, %c0_i32_0 : i32, i32
  }
  func.func @transform_1(%arg0: i32) -> (i32, i32) {
    %c0_i32 = arith.constant 0 : i32
    %c0_i32_0 = arith.constant 0 : i32
    %c0_i32_1 = arith.constant 0 : i32
    return %c0_i32, %c0_i32_0 : i32, i32
  }
  func.func @transform_2(%arg0: i32) -> (i32, i32, i32) {
    %c0_i32 = arith.constant 0 : i32
    %c0_i32_0 = arith.constant 0 : i32
    %c0_i32_1 = arith.constant 0 : i32
    %c0_i32_2 = arith.constant 0 : i32
    return %c0_i32, %c0_i32_0, %c0_i32_1 : i32, i32, i32
  }
  func.func @transform_3(%arg0: i32) -> (i32, i32, i32) {
    %c0_i32 = arith.constant 0 : i32
    %c0_i32_0 = arith.constant 0 : i32
    %c0_i32_1 = arith.constant 0 : i32
    %c0_i32_2 = arith.constant 0 : i32
    return %c0_i32, %c0_i32_0, %c0_i32_1 : i32, i32, i32
  }
  func.func @transform_4(%arg0: i32) -> (i32, i32, i32) {
    %c0_i32 = arith.constant 0 : i32
    %c0_i32_0 = arith.constant 0 : i32
    %c0_i32_1 = arith.constant 0 : i32
    %c0_i32_2 = arith.constant 0 : i32
    return %c0_i32, %c0_i32_0, %c0_i32_1 : i32, i32, i32
  }
  func.func @transform_5(%arg0: i32) -> (i32, i32, i32) {
    %c0_i32 = arith.constant 0 : i32
    %c0_i32_0 = arith.constant 0 : i32
    %c0_i32_1 = arith.constant 0 : i32
    %c0_i32_2 = arith.constant 0 : i32
    return %c0_i32, %c0_i32_0, %c0_i32_1 : i32, i32, i32
  }
  func.func @transform_6(%arg0: i32) -> (i32, i32, i32) {
    %c0_i32 = arith.constant 0 : i32
    %c0_i32_0 = arith.constant 0 : i32
    %c0_i32_1 = arith.constant 0 : i32
    %c0_i32_2 = arith.constant 0 : i32
    return %c0_i32, %c0_i32_0, %c0_i32_1 : i32, i32, i32
  }
  func.func @transform_7(%arg0: i32) -> (i32, i32) {
    %c0_i32 = arith.constant 0 : i32
    %c0_i32_0 = arith.constant 0 : i32
    %c0_i32_1 = arith.constant 0 : i32
    return %c0_i32, %c0_i32_0 : i32, i32
  }
  func.func @transform_8(%arg0: i32) -> (i32, i32) {
    %c0_i32 = arith.constant 0 : i32
    %c0_i32_0 = arith.constant 0 : i32
    %c0_i32_1 = arith.constant 0 : i32
    return %c0_i32, %c0_i32_0 : i32, i32
  }
  func.func @transform_9(%arg0: i32) -> (i32, i32) {
    %c0_i32 = arith.constant 0 : i32
    %c0_i32_0 = arith.constant 0 : i32
    %c0_i32_1 = arith.constant 0 : i32
    return %c0_i32, %c0_i32_0 : i32, i32
  }
  func.func @transform_10(%arg0: i32) -> (i32, i32, i32) {
    %c0_i32 = arith.constant 0 : i32
    %c0_i32_0 = arith.constant 0 : i32
    %c0_i32_1 = arith.constant 0 : i32
    %c0_i32_2 = arith.constant 0 : i32
    return %c0_i32, %c0_i32_0, %c0_i32_1 : i32, i32, i32
  }
  func.func @transform_11(%arg0: i32) -> (i32, i32, i32) {
    %c0_i32 = arith.constant 0 : i32
    %c0_i32_0 = arith.constant 0 : i32
    %c0_i32_1 = arith.constant 0 : i32
    %c0_i32_2 = arith.constant 0 : i32
    return %c0_i32, %c0_i32_0, %c0_i32_1 : i32, i32, i32
  }
}

</mosaic_0001>

<llo_original>
// kernel: rnn_forward.1
$region0: #{rnn_forward.1}
  #allocation0 [shape = 'u32[]', space=smem, size = 0x4, offset = 0x4, fixed_abs, tag = 'smem constant byte address 0x4 - core index']
  #allocation1 [shape = 'u32[72,128]{1,0:T(1,128)}', space=vmem, size = 0x9000, scoped, tag = 'internal scratch']
  #allocation2 [shape = 'f32[16,128]{1,0:T(8,128)}', space=vmem, size = 0x2000, scoped, tag = 'scratch operand']
  #allocation3 [shape = 'f32[16,32]{1,0:T(8,128)}', space=vmem, size = 0x2000, scoped, tag = 'scratch operand']
  %s0 = inlined_call_operand.vmem [shape: f32[16,32], index: 0, kind: input, shape index: {}]
  %s1 = inlined_call_operand.vmem [shape: f32[32,128], index: 1, kind: input, shape index: {}]
  %s2 = inlined_call_operand.vmem [shape: f32[1,32,128], index: 2, kind: input, shape index: {}]
  %s3 = inlined_call_operand.vmem [shape: f32[2,32,128], index: 3, kind: input, shape index: {}]
  %s4 = inlined_call_operand.vmem [shape: f32[2,1,128], index: 4, kind: input, shape index: {}]
  %s5 = inlined_call_operand.vmem [shape: f32[2,2,32], index: 5, kind: input, shape index: {}]
  %s6 = inlined_call_operand.vmem [shape: f32[2,2,32], index: 6, kind: input, shape index: {}]
  %s7 = inlined_call_operand.vmem [shape: f32[32,128], index: 7, kind: input, shape index: {}]
  %s8 = inlined_call_operand.vmem [shape: f32[1,128], index: 8, kind: input, shape index: {}]
  %s9 = inlined_call_operand.hbm [shape: f32[2,128], index: 9, kind: output, shape index: {0}]
  %s10 = inlined_call_operand.hbm [shape: f32[2,2,32], index: 10, kind: output, shape index: {1}]
  %s11 = inlined_call_operand.hbm [shape: f32[2,2,32], index: 11, kind: output, shape index: {2}]
  %12 = xla_tuple %s9, %s10, %s11
  %s13 = sld [smem:[#allocation0]]
  $region62: #{rnn_forward.1} parent=0
    _
  %s15 = ssub.s32 1, %s13
  %s16 = scalar_select 0, %s15, %s13
  $region1: #{rnn_forward.1} parent=0
    #allocation4 [shape = 'u8[1024]{0}', space=vmem, size = 0x400, scoped, tag = 'output window, operand 0, single buffered']
    #allocation5 [shape = 's32[1]{0}', space=sflag, size = 0x4, scoped, tag = 'scoped memory for rnn_forward.1']
    #allocation6 [shape = 'u8[2048]{0}', space=vmem, size = 0x800, scoped, tag = 'output window, operand 1, single buffered']
    #allocation7 [shape = 's32[1]{0}', space=sflag, size = 0x4, scoped, tag = 'scoped memory for rnn_forward.1']
    #allocation8 [shape = 'u8[2048]{0}', space=vmem, size = 0x800, scoped, tag = 'output window, operand 2, single buffered']
    %17 = vsyncpa [#allocation5], 0
    %18 = vsyncpa [#allocation7], 0
    // Predicated region
    $region2: #{rnn_forward.1} parent=1 // pred_check
      _
    $region3: #{rnn_forward.1} parent=1 // pred_check_branch
      %20 = sbr.rel (0) target = $region5
    $region4: #{rnn_forward.1} parent=1 // pred_region
      _
    $region5: #{rnn_forward.1} parent=1 // pred_fallthru
      _
    // Predicated region
    $region6: #{rnn_forward.1} parent=1 // pred_check
      _
    $region7: #{rnn_forward.1} parent=1 // pred_check_branch
      %22 = sbr.rel (0) target = $region9
    $region8: #{rnn_forward.1} parent=1 // pred_region
      _
    $region9: #{rnn_forward.1} parent=1 // pred_fallthru
      _
    // Predicated region
    $region10: #{rnn_forward.1} parent=1 // pred_check
      _
    $region11: #{rnn_forward.1} parent=1 // pred_check_branch
      %24 = sbr.rel (0) target = $region13
    $region12: #{rnn_forward.1} parent=1 // pred_region
      _
    $region13: #{rnn_forward.1} parent=1 // pred_fallthru
      _
    // Predicated region
    $region14: #{rnn_forward.1} parent=1 // pred_check
      _
    $region15: #{rnn_forward.1} parent=1 // pred_check_branch
      %26 = sbr.rel (0) target = $region17
    $region16: #{rnn_forward.1} parent=1 // pred_region
      _
    $region17: #{rnn_forward.1} parent=1 // pred_fallthru
      _
    // Predicated region
    $region18: #{rnn_forward.1} parent=1 // pred_check
      _
    $region19: #{rnn_forward.1} parent=1 // pred_check_branch
      %28 = sbr.rel (0) target = $region21
    $region20: #{rnn_forward.1} parent=1 // pred_region
      _
    $region21: #{rnn_forward.1} parent=1 // pred_fallthru
      _
    // Predicated region
    $region22: #{rnn_forward.1} parent=1 // pred_check
      _
    $region23: #{rnn_forward.1} parent=1 // pred_check_branch
      %30 = sbr.rel (0) target = $region25
    $region24: #{rnn_forward.1} parent=1 // pred_region
      _
    $region25: #{rnn_forward.1} parent=1 // pred_fallthru
      _
    // Predicated region
    $region26: #{rnn_forward.1} parent=1 // pred_check
      _
    $region27: #{rnn_forward.1} parent=1 // pred_check_branch
      %32 = sbr.rel (0) target = $region29
    $region28: #{rnn_forward.1} parent=1 // pred_region
      _
    $region29: #{rnn_forward.1} parent=1 // pred_fallthru
      _
    // Predicated region
    $region30: #{rnn_forward.1} parent=1 // pred_check
      _
    $region31: #{rnn_forward.1} parent=1 // pred_check_branch
      %34 = sbr.rel (0) target = $region33
    $region32: #{rnn_forward.1} parent=1 // pred_region
      _
    $region33: #{rnn_forward.1} parent=1 // pred_fallthru
      _
    // Predicated region
    $region34: #{rnn_forward.1} parent=1 // pred_check
      _
    $region35: #{rnn_forward.1} parent=1 // pred_check_branch
      %36 = sbr.rel (0) target = $region37
    $region36: #{rnn_forward.1} parent=1 // pred_region
      _
    $region37: #{rnn_forward.1} parent=1 // pred_fallthru
      _
    %v37 = vld [vmem:[%s0] sm:$0xff]
    %v38 = vld [vmem:[%s0 + $0x8] sm:$0xff]
    %v39 = vld [vmem:[%s1] sm:$0xff]
    %v40 = vld [vmem:[%s1 + $0x8] sm:$0xff]
    %v41 = vld [vmem:[%s1 + $0x10] sm:$0xff]
    %v42 = vld [vmem:[%s1 + $0x18] sm:$0xff]
    %v43 = vld [vmem:[%s4] sm:$0x1]
    %v45 = vperm.slane %v43, 0
    %vm47 = vcmask 261120
    %v49 = vsel %vm47, %v37, 0
    %v52 = vsel %vm47, %v38, 0
    %54 = vmatpush.msra.mxu0 0.0
    %55 = vmatpush.msra.mxu0 0.0
    %56 = vmatpush.msra.mxu0 0.0
    %57 = vmatpush.msra.mxu0 0.0
    %58 = vmatpush.msra.mxu0 0.0
    %59 = vmatpush.msra.mxu0 0.0
    %60 = vmatpush.msra.mxu0 0.0
    %61 = vmatpush.msra.mxu0 0.0
    %62 = vmatpush.msra.mxu0 0.0
    %63 = vmatpush.msra.mxu0 0.0
    %64 = vmatpush.msra.mxu0 0.0
    %65 = vmatpush.msra.mxu0 0.0
    %66 = vmatpush.msra.mxu0 %v42
    %67 = vmatpush.msra.mxu0 %v41
    %68 = vmatpush.msra.mxu0 %v40
    %69 = vmatpush.msra.mxu0 %v39
    %70 = vmatmul.f32.gmra.mxu0 %v49
    %v71 = vpop.f32.mrf.mxu0
    %v72 = vadd.f32 %v45, %v71
    %73 = vmatmul.f32.gmra.mxu0 %v52
    %v74 = vpop.f32.mrf.mxu0
    %v75 = vadd.f32 %v45, %v74
    %76 = vdwg.mxu0
    %77 = vst [vmem:[#allocation2] sm:$0xff] %v72
    %78 = vst [vmem:[#allocation2 + $0x8] sm:$0xff] %v75
    %v79 = vld [vmem:[%s3] sm:$0xff]
    %v80 = vld [vmem:[%s3 + $0x8] sm:$0xff]
    %v81 = vld [vmem:[%s3 + $0x10] sm:$0xff]
    %v82 = vld [vmem:[%s3 + $0x18] sm:$0xff]
    %v83 = vld [vmem:[%s5] sm:$0x3]
    %v84 = vld [vmem:[%s6] sm:$0x3]
    %v85 = vld [vmem:[#allocation2] sm:$0x3]
    %v87 = vsel %vm47, %v83, 0
    %89 = vmatpush.msra.mxu0 0.0
    %90 = vmatpush.msra.mxu0 0.0
    %91 = vmatpush.msra.mxu0 0.0
    %92 = vmatpush.msra.mxu0 0.0
    %93 = vmatpush.msra.mxu0 0.0
    %94 = vmatpush.msra.mxu0 0.0
    %95 = vmatpush.msra.mxu0 0.0
    %96 = vmatpush.msra.mxu0 0.0
    %97 = vmatpush.msra.mxu0 0.0
    %98 = vmatpush.msra.mxu0 0.0
    %99 = vmatpush.msra.mxu0 0.0
    %100 = vmatpush.msra.mxu0 0.0
    %101 = vmatpush.msra.mxu0 %v82
    %102 = vmatpush.msra.mxu0 %v81
    %103 = vmatpush.msra.mxu0 %v80
    %104 = vmatpush.msra.mxu0 %v79
    %105 = vmatmul.f32.gmra.mxu0 %v87
    %v106 = vpop.f32.mrf.mxu0
    %v107 = vadd.f32 0.0, %v106
    %108 = vdwg.mxu0
    %v109 = vadd.f32 %v85, %v107
    %v110 = vxor.u32 %v109, 2147483648
    %v111 = vmul.f32 %v110, 1.442695
    %v112 = vpow.pop %v111
    %v113 = vadd.f32 %v112, 1.0
    %v114 = vrcp.pop %v113
    %v115 = vmul.f32 %v113, %v114
    %v116 = vsub.f32 1.0, %v115
    %v117 = vmul.f32 %v114, %v116
    %v118 = vadd.f32 %v114, %v117
    %vm119 = vweird.f32 %v113
    %vm120 = vweird.f32 %v114
    %vm121 = vmor %vm119, %vm120
    %v122 = vsel %vm121, %v114, %v118
    %v123 = vand.u32 2147483647, %v113
    %vm124 = vcmp.eq.f32.partialorder %v123, 8.507059e+37
    %v125 = vand.u32 %v113, 2147483648
    %v126 = vor.u32 1.1754944e-38, %v125
    %v127 = vsel %vm124, %v126, %v122
    %v128 = vmul.f32 1.0, %v127
    %v129 = vtanh.pop %v109
    %131 = vrot.lane.b32.xlu0 %v84, 32
    %v132 = vpop.permute.xlu0 %131
    %v134 = vmul.f32 %v128, %v132
    %136 = vrot.lane.b32.xlu0 %v129, 64
    %v137 = vpop.permute.xlu0 %136
    %v139 = vmul.f32 %v128, %v137
    %141 = vrot.lane.b32.xlu0 %v139, 32
    %v142 = vpop.permute.xlu0 %141
    %v144 = vadd.f32 %v134, %v142
    %v145 = vtanh.pop %v144
    %147 = vrot.lane.b32.xlu0 %v145, 64
    %v148 = vpop.permute.xlu0 %147
    %v150 = vmul.f32 %v128, %v148
    %152 = vrot.lane.b32.xlu0 %v150, 32
    %v153 = vpop.permute.xlu0 %152
    %vm155 = vcmask 254976
    %156 = vst.msk [vmem:[#allocation3] sm:$0x3] %vm155, %v153
    %v157 = vld [vmem:[#allocation2 + $0x2] sm:$0x3]
    %v158 = vsel %vm47, %v153, 0
    %160 = vmatpush.msra.mxu0 0.0
    %161 = vmatpush.msra.mxu0 0.0
    %162 = vmatpush.msra.mxu0 0.0
    %163 = vmatpush.msra.mxu0 0.0
    %164 = vmatpush.msra.mxu0 0.0
    %165 = vmatpush.msra.mxu0 0.0
    %166 = vmatpush.msra.mxu0 0.0
    %167 = vmatpush.msra.mxu0 0.0
    %168 = vmatpush.msra.mxu0 0.0
    %169 = vmatpush.msra.mxu0 0.0
    %170 = vmatpush.msra.mxu0 0.0
    %171 = vmatpush.msra.mxu0 0.0
    %172 = vmatpush.msra.mxu0 %v82
    %173 = vmatpush.msra.mxu0 %v81
    %174 = vmatpush.msra.mxu0 %v80
    %175 = vmatpush.msra.mxu0 %v79
    %176 = vmatmul.f32.gmra.mxu0 %v158
    %v177 = vpop.f32.mrf.mxu0
    %v178 = vadd.f32 0.0, %v177
    %179 = vdwg.mxu0
    %v180 = vadd.f32 %v157, %v178
    %v181 = vxor.u32 %v180, 2147483648
    %v182 = vmul.f32 %v181, 1.442695
    %v183 = vpow.pop %v182
    %v184 = vadd.f32 %v183, 1.0
    %v185 = vrcp.pop %v184
    %v186 = vmul.f32 %v184, %v185
    %v187 = vsub.f32 1.0, %v186
    %v188 = vmul.f32 %v185, %v187
    %v189 = vadd.f32 %v185, %v188
    %vm190 = vweird.f32 %v184
    %vm191 = vweird.f32 %v185
    %vm192 = vmor %vm190, %vm191
    %v193 = vsel %vm192, %v185, %v189
    %v194 = vand.u32 2147483647, %v184
    %vm195 = vcmp.eq.f32.partialorder %v194, 8.507059e+37
    %v196 = vand.u32 %v184, 2147483648
    %v197 = vor.u32 1.1754944e-38, %v196
    %v198 = vsel %vm195, %v197, %v193
    %v199 = vmul.f32 1.0, %v198
    %v200 = vtanh.pop %v180
    %v201 = vmul.f32 %v199, %v144
    %203 = vrot.lane.b32.xlu0 %v200, 64
    %v204 = vpop.permute.xlu0 %203
    %v206 = vmul.f32 %v199, %v204
    %208 = vrot.lane.b32.xlu0 %v206, 32
    %v209 = vpop.permute.xlu0 %208
    %v211 = vadd.f32 %v201, %v209
    %v212 = vtanh.pop %v211
    %214 = vrot.lane.b32.xlu0 %v212, 64
    %v215 = vpop.permute.xlu0 %214
    %v217 = vmul.f32 %v199, %v215
    %219 = vrot.lane.b32.xlu0 %v217, 32
    %v220 = vpop.permute.xlu0 %219
    %222 = vst.msk [vmem:[#allocation3 + $0x2] sm:$0x3] %vm155, %v220
    %v223 = vld [vmem:[#allocation2 + $0x4] sm:$0x3]
    %v224 = vsel %vm47, %v220, 0
    %226 = vmatpush.msra.mxu0 0.0
    %227 = vmatpush.msra.mxu0 0.0
    %228 = vmatpush.msra.mxu0 0.0
    %229 = vmatpush.msra.mxu0 0.0
    %230 = vmatpush.msra.mxu0 0.0
    %231 = vmatpush.msra.mxu0 0.0
    %232 = vmatpush.msra.mxu0 0.0
    %233 = vmatpush.msra.mxu0 0.0
    %234 = vmatpush.msra.mxu0 0.0
    %235 = vmatpush.msra.mxu0 0.0
    %236 = vmatpush.msra.mxu0 0.0
    %237 = vmatpush.msra.mxu0 0.0
    %238 = vmatpush.msra.mxu0 %v82
    %239 = vmatpush.msra.mxu0 %v81
    %240 = vmatpush.msra.mxu0 %v80
    %241 = vmatpush.msra.mxu0 %v79
    %242 = vmatmul.f32.gmra.mxu0 %v224
    %v243 = vpop.f32.mrf.mxu0
    %v244 = vadd.f32 0.0, %v243
    %245 = vdwg.mxu0
    %v246 = vadd.f32 %v223, %v244
    %v247 = vxor.u32 %v246, 2147483648
    %v248 = vmul.f32 %v247, 1.442695
    %v249 = vpow.pop %v248
    %v250 = vadd.f32 %v249, 1.0
    %v251 = vrcp.pop %v250
    %v252 = vmul.f32 %v250, %v251
    %v253 = vsub.f32 1.0, %v252
    %v254 = vmul.f32 %v251, %v253
    %v255 = vadd.f32 %v251, %v254
    %vm256 = vweird.f32 %v250
    %vm257 = vweird.f32 %v251
    %vm258 = vmor %vm256, %vm257
    %v259 = vsel %vm258, %v251, %v255
    %v260 = vand.u32 2147483647, %v250
    %vm261 = vcmp.eq.f32.partialorder %v260, 8.507059e+37
    %v262 = vand.u32 %v250, 2147483648
    %v263 = vor.u32 1.1754944e-38, %v262
    %v264 = vsel %vm261, %v263, %v259
    %v265 = vmul.f32 1.0, %v264
    %v266 = vtanh.pop %v246
    %v267 = vmul.f32 %v265, %v211
    %269 = vrot.lane.b32.xlu0 %v266, 64
    %v270 = vpop.permute.xlu0 %269
    %v272 = vmul.f32 %v265, %v270
    %274 = vrot.lane.b32.xlu0 %v272, 32
    %v275 = vpop.permute.xlu0 %274
    %v277 = vadd.f32 %v267, %v275
    %v278 = vtanh.pop %v277
    %280 = vrot.lane.b32.xlu0 %v278, 64
    %v281 = vpop.permute.xlu0 %280
    %v283 = vmul.f32 %v265, %v281
    %285 = vrot.lane.b32.xlu0 %v283, 32
    %v286 = vpop.permute.xlu0 %285
    %288 = vst.msk [vmem:[#allocation3 + $0x4] sm:$0x3] %vm155, %v286
    %v289 = vld [vmem:[#allocation2 + $0x6] sm:$0x3]
    %v290 = vsel %vm47, %v286, 0
    %292 = vmatpush.msra.mxu0 0.0
    %293 = vmatpush.msra.mxu0 0.0
    %294 = vmatpush.msra.mxu0 0.0
    %295 = vmatpush.msra.mxu0 0.0
    %296 = vmatpush.msra.mxu0 0.0
    %297 = vmatpush.msra.mxu0 0.0
    %298 = vmatpush.msra.mxu0 0.0
    %299 = vmatpush.msra.mxu0 0.0
    %300 = vmatpush.msra.mxu0 0.0
    %301 = vmatpush.msra.mxu0 0.0
    %302 = vmatpush.msra.mxu0 0.0
    %303 = vmatpush.msra.mxu0 0.0
    %304 = vmatpush.msra.mxu0 %v82
    %305 = vmatpush.msra.mxu0 %v81
    %306 = vmatpush.msra.mxu0 %v80
    %307 = vmatpush.msra.mxu0 %v79
    %308 = vmatmul.f32.gmra.mxu0 %v290
    %v309 = vpop.f32.mrf.mxu0
    %v310 = vadd.f32 0.0, %v309
    %311 = vdwg.mxu0
    %v312 = vadd.f32 %v289, %v310
    %v313 = vxor.u32 %v312, 2147483648
    %v314 = vmul.f32 %v313, 1.442695
    %v315 = vpow.pop %v314
    %v316 = vadd.f32 %v315, 1.0
    %v317 = vrcp.pop %v316
    %v318 = vmul.f32 %v316, %v317
    %v319 = vsub.f32 1.0, %v318
    %v320 = vmul.f32 %v317, %v319
    %v321 = vadd.f32 %v317, %v320
    %vm322 = vweird.f32 %v316
    %vm323 = vweird.f32 %v317
    %vm324 = vmor %vm322, %vm323
    %v325 = vsel %vm324, %v317, %v321
    %v326 = vand.u32 2147483647, %v316
    %vm327 = vcmp.eq.f32.partialorder %v326, 8.507059e+37
    %v328 = vand.u32 %v316, 2147483648
    %v329 = vor.u32 1.1754944e-38, %v328
    %v330 = vsel %vm327, %v329, %v325
    %v331 = vmul.f32 1.0, %v330
    %v332 = vtanh.pop %v312
    %v333 = vmul.f32 %v331, %v277
    %335 = vrot.lane.b32.xlu0 %v332, 64
    %v336 = vpop.permute.xlu0 %335
    %v338 = vmul.f32 %v331, %v336
    %340 = vrot.lane.b32.xlu0 %v338, 32
    %v341 = vpop.permute.xlu0 %340
    %v343 = vadd.f32 %v333, %v341
    %v344 = vtanh.pop %v343
    %346 = vrot.lane.b32.xlu0 %v344, 64
    %v347 = vpop.permute.xlu0 %346
    %v349 = vmul.f32 %v331, %v347
    %351 = vrot.lane.b32.xlu0 %v349, 32
    %v352 = vpop.permute.xlu0 %351
    %354 = vst.msk [vmem:[#allocation3 + $0x6] sm:$0x3] %vm155, %v352
    %v355 = vld [vmem:[#allocation2 + $0x8] sm:$0x3]
    %v356 = vsel %vm47, %v352, 0
    %358 = vmatpush.msra.mxu0 0.0
    %359 = vmatpush.msra.mxu0 0.0
    %360 = vmatpush.msra.mxu0 0.0
    %361 = vmatpush.msra.mxu0 0.0
    %362 = vmatpush.msra.mxu0 0.0
    %363 = vmatpush.msra.mxu0 0.0
    %364 = vmatpush.msra.mxu0 0.0
    %365 = vmatpush.msra.mxu0 0.0
    %366 = vmatpush.msra.mxu0 0.0
    %367 = vmatpush.msra.mxu0 0.0
    %368 = vmatpush.msra.mxu0 0.0
    %369 = vmatpush.msra.mxu0 0.0
    %370 = vmatpush.msra.mxu0 %v82
    %371 = vmatpush.msra.mxu0 %v81
    %372 = vmatpush.msra.mxu0 %v80
    %373 = vmatpush.msra.mxu0 %v79
    %374 = vmatmul.f32.gmra.mxu0 %v356
    %v375 = vpop.f32.mrf.mxu0
    %v376 = vadd.f32 0.0, %v375
    %377 = vdwg.mxu0
    %v378 = vadd.f32 %v355, %v376
    %v379 = vxor.u32 %v378, 2147483648
    %v380 = vmul.f32 %v379, 1.442695
    %v381 = vpow.pop %v380
    %v382 = vadd.f32 %v381, 1.0
    %v383 = vrcp.pop %v382
    %v384 = vmul.f32 %v382, %v383
    %v385 = vsub.f32 1.0, %v384
    %v386 = vmul.f32 %v383, %v385
    %v387 = vadd.f32 %v383, %v386
    %vm388 = vweird.f32 %v382
    %vm389 = vweird.f32 %v383
    %vm390 = vmor %vm388, %vm389
    %v391 = vsel %vm390, %v383, %v387
    %v392 = vand.u32 2147483647, %v382
    %vm393 = vcmp.eq.f32.partialorder %v392, 8.507059e+37
    %v394 = vand.u32 %v382, 2147483648
    %v395 = vor.u32 1.1754944e-38, %v394
    %v396 = vsel %vm393, %v395, %v391
    %v397 = vmul.f32 1.0, %v396
    %v398 = vtanh.pop %v378
    %v399 = vmul.f32 %v397, %v343
    %401 = vrot.lane.b32.xlu0 %v398, 64
    %v402 = vpop.permute.xlu0 %401
    %v404 = vmul.f32 %v397, %v402
    %406 = vrot.lane.b32.xlu0 %v404, 32
    %v407 = vpop.permute.xlu0 %406
    %v409 = vadd.f32 %v399, %v407
    %v410 = vtanh.pop %v409
    %412 = vrot.lane.b32.xlu0 %v410, 64
    %v413 = vpop.permute.xlu0 %412
    %v415 = vmul.f32 %v397, %v413
    %417 = vrot.lane.b32.xlu0 %v415, 32
    %v418 = vpop.permute.xlu0 %417
    %420 = vst.msk [vmem:[#allocation3 + $0x8] sm:$0x3] %vm155, %v418
    %v421 = vld [vmem:[#allocation2 + $0xa] sm:$0x3]
    %v422 = vsel %vm47, %v418, 0
    %424 = vmatpush.msra.mxu0 0.0
    %425 = vmatpush.msra.mxu0 0.0
    %426 = vmatpush.msra.mxu0 0.0
    %427 = vmatpush.msra.mxu0 0.0
    %428 = vmatpush.msra.mxu0 0.0
    %429 = vmatpush.msra.mxu0 0.0
    %430 = vmatpush.msra.mxu0 0.0
    %431 = vmatpush.msra.mxu0 0.0
    %432 = vmatpush.msra.mxu0 0.0
    %433 = vmatpush.msra.mxu0 0.0
    %434 = vmatpush.msra.mxu0 0.0
    %435 = vmatpush.msra.mxu0 0.0
    %436 = vmatpush.msra.mxu0 %v82
    %437 = vmatpush.msra.mxu0 %v81
    %438 = vmatpush.msra.mxu0 %v80
    %439 = vmatpush.msra.mxu0 %v79
    %440 = vmatmul.f32.gmra.mxu0 %v422
    %v441 = vpop.f32.mrf.mxu0
    %v442 = vadd.f32 0.0, %v441
    %443 = vdwg.mxu0
    %v444 = vadd.f32 %v421, %v442
    %v445 = vxor.u32 %v444, 2147483648
    %v446 = vmul.f32 %v445, 1.442695
    %v447 = vpow.pop %v446
    %v448 = vadd.f32 %v447, 1.0
    %v449 = vrcp.pop %v448
    %v450 = vmul.f32 %v448, %v449
    %v451 = vsub.f32 1.0, %v450
    %v452 = vmul.f32 %v449, %v451
    %v453 = vadd.f32 %v449, %v452
    %vm454 = vweird.f32 %v448
    %vm455 = vweird.f32 %v449
    %vm456 = vmor %vm454, %vm455
    %v457 = vsel %vm456, %v449, %v453
    %v458 = vand.u32 2147483647, %v448
    %vm459 = vcmp.eq.f32.partialorder %v458, 8.507059e+37
    %v460 = vand.u32 %v448, 2147483648
    %v461 = vor.u32 1.1754944e-38, %v460
    %v462 = vsel %vm459, %v461, %v457
    %v463 = vmul.f32 1.0, %v462
    %v464 = vtanh.pop %v444
    %v465 = vmul.f32 %v463, %v409
    %467 = vrot.lane.b32.xlu0 %v464, 64
    %v468 = vpop.permute.xlu0 %467
    %v470 = vmul.f32 %v463, %v468
    %472 = vrot.lane.b32.xlu0 %v470, 32
    %v473 = vpop.permute.xlu0 %472
    %v475 = vadd.f32 %v465, %v473
    %v476 = vtanh.pop %v475
    %478 = vrot.lane.b32.xlu0 %v476, 64
    %v479 = vpop.permute.xlu0 %478
    %v481 = vmul.f32 %v463, %v479
    %483 = vrot.lane.b32.xlu0 %v481, 32
    %v484 = vpop.permute.xlu0 %483
    %486 = vst.msk [vmem:[#allocation3 + $0xa] sm:$0x3] %vm155, %v484
    %v487 = vld [vmem:[#allocation2 + $0xc] sm:$0x3]
    %v488 = vsel %vm47, %v484, 0
    %490 = vmatpush.msra.mxu0 0.0
    %491 = vmatpush.msra.mxu0 0.0
    %492 = vmatpush.msra.mxu0 0.0
    %493 = vmatpush.msra.mxu0 0.0
    %494 = vmatpush.msra.mxu0 0.0
    %495 = vmatpush.msra.mxu0 0.0
    %496 = vmatpush.msra.mxu0 0.0
    %497 = vmatpush.msra.mxu0 0.0
    %498 = vmatpush.msra.mxu0 0.0
    %499 = vmatpush.msra.mxu0 0.0
    %500 = vmatpush.msra.mxu0 0.0
    %501 = vmatpush.msra.mxu0 0.0
    %502 = vmatpush.msra.mxu0 %v82
    %503 = vmatpush.msra.mxu0 %v81
    %504 = vmatpush.msra.mxu0 %v80
    %505 = vmatpush.msra.mxu0 %v79
    %506 = vmatmul.f32.gmra.mxu0 %v488
    %v507 = vpop.f32.mrf.mxu0
    %v508 = vadd.f32 0.0, %v507
    %509 = vdwg.mxu0
    %v510 = vadd.f32 %v487, %v508
    %v511 = vxor.u32 %v510, 2147483648
    %v512 = vmul.f32 %v511, 1.442695
    %v513 = vpow.pop %v512
    %v514 = vadd.f32 %v513, 1.0
    %v515 = vrcp.pop %v514
    %v516 = vmul.f32 %v514, %v515
    %v517 = vsub.f32 1.0, %v516
    %v518 = vmul.f32 %v515, %v517
    %v519 = vadd.f32 %v515, %v518
    %vm520 = vweird.f32 %v514
    %vm521 = vweird.f32 %v515
    %vm522 = vmor %vm520, %vm521
    %v523 = vsel %vm522, %v515, %v519
    %v524 = vand.u32 2147483647, %v514
    %vm525 = vcmp.eq.f32.partialorder %v524, 8.507059e+37
    %v526 = vand.u32 %v514, 2147483648
    %v527 = vor.u32 1.1754944e-38, %v526
    %v528 = vsel %vm525, %v527, %v523
    %v529 = vmul.f32 1.0, %v528
    %v530 = vtanh.pop %v510
    %v531 = vmul.f32 %v529, %v475
    %533 = vrot.lane.b32.xlu0 %v530, 64
    %v534 = vpop.permute.xlu0 %533
    %v536 = vmul.f32 %v529, %v534
    %538 = vrot.lane.b32.xlu0 %v536, 32
    %v539 = vpop.permute.xlu0 %538
    %v541 = vadd.f32 %v531, %v539
    %v542 = vtanh.pop %v541
    %544 = vrot.lane.b32.xlu0 %v542, 64
    %v545 = vpop.permute.xlu0 %544
    %v547 = vmul.f32 %v529, %v545
    %549 = vrot.lane.b32.xlu0 %v547, 32
    %v550 = vpop.permute.xlu0 %549
    %552 = vst.msk [vmem:[#allocation3 + $0xc] sm:$0x3] %vm155, %v550
    %v553 = vld [vmem:[#allocation2 + $0xe] sm:$0x3]
    %v554 = vsel %vm47, %v550, 0
    %556 = vmatpush.msra.mxu0 0.0
    %557 = vmatpush.msra.mxu0 0.0
    %558 = vmatpush.msra.mxu0 0.0
    %559 = vmatpush.msra.mxu0 0.0
    %560 = vmatpush.msra.mxu0 0.0
    %561 = vmatpush.msra.mxu0 0.0
    %562 = vmatpush.msra.mxu0 0.0
    %563 = vmatpush.msra.mxu0 0.0
    %564 = vmatpush.msra.mxu0 0.0
    %565 = vmatpush.msra.mxu0 0.0
    %566 = vmatpush.msra.mxu0 0.0
    %567 = vmatpush.msra.mxu0 0.0
    %568 = vmatpush.msra.mxu0 %v82
    %569 = vmatpush.msra.mxu0 %v81
    %570 = vmatpush.msra.mxu0 %v80
    %571 = vmatpush.msra.mxu0 %v79
    %572 = vmatmul.f32.gmra.mxu0 %v554
    %v573 = vpop.f32.mrf.mxu0
    %v574 = vadd.f32 0.0, %v573
    %575 = vdwg.mxu0
    %v576 = vadd.f32 %v553, %v574
    %v577 = vxor.u32 %v576, 2147483648
    %v578 = vmul.f32 %v577, 1.442695
    %v579 = vpow.pop %v578
    %v580 = vadd.f32 %v579, 1.0
    %v581 = vrcp.pop %v580
    %v582 = vmul.f32 %v580, %v581
    %v583 = vsub.f32 1.0, %v582
    %v584 = vmul.f32 %v581, %v583
    %v585 = vadd.f32 %v581, %v584
    %vm586 = vweird.f32 %v580
    %vm587 = vweird.f32 %v581
    %vm588 = vmor %vm586, %vm587
    %v589 = vsel %vm588, %v581, %v585
    %v590 = vand.u32 2147483647, %v580
    %vm591 = vcmp.eq.f32.partialorder %v590, 8.507059e+37
    %v592 = vand.u32 %v580, 2147483648
    %v593 = vor.u32 1.1754944e-38, %v592
    %v594 = vsel %vm591, %v593, %v589
    %v595 = vmul.f32 1.0, %v594
    %v596 = vtanh.pop %v576
    %v597 = vmul.f32 %v595, %v541
    %599 = vrot.lane.b32.xlu0 %v596, 64
    %v600 = vpop.permute.xlu0 %599
    %v602 = vmul.f32 %v595, %v600
    %604 = vrot.lane.b32.xlu0 %v602, 32
    %v605 = vpop.permute.xlu0 %604
    %v607 = vadd.f32 %v597, %v605
    %v608 = vtanh.pop %v607
    %610 = vrot.lane.b32.xlu0 %v608, 64
    %v611 = vpop.permute.xlu0 %610
    %v613 = vmul.f32 %v595, %v611
    %615 = vrot.lane.b32.xlu0 %v613, 32
    %v616 = vpop.permute.xlu0 %615
    %618 = vst.msk [vmem:[#allocation3 + $0xe] sm:$0x3] %vm155, %v616
    %619 = vst.msk [vmem:[#allocation6] sm:$0x3] %vm155, %v616
    %621 = vrot.lane.b32.xlu0 %v607, 96
    %v622 = vpop.permute.xlu0 %621
    %624 = vst.msk [vmem:[#allocation8] sm:$0x3] %vm155, %v622
    %v625 = vld [vmem:[#allocation3] sm:$0xff]
    %v626 = vld [vmem:[#allocation3 + $0x8] sm:$0xff]
    %v627 = vld [vmem:[%s2] sm:$0xff]
    %v628 = vld [vmem:[%s2 + $0x8] sm:$0xff]
    %v629 = vld [vmem:[%s2 + $0x10] sm:$0xff]
    %v630 = vld [vmem:[%s2 + $0x18] sm:$0xff]
    %s631 = scalar_lea.vmem %s4, 1
    %v632 = vld [vmem:[%s631] sm:$0x1]
    %v634 = vperm.slane %v632, 0
    %v637 = vsel %vm47, %v625, 0
    %v640 = vsel %vm47, %v626, 0
    %642 = vmatpush.msra.mxu0 0.0
    %643 = vmatpush.msra.mxu0 0.0
    %644 = vmatpush.msra.mxu0 0.0
    %645 = vmatpush.msra.mxu0 0.0
    %646 = vmatpush.msra.mxu0 0.0
    %647 = vmatpush.msra.mxu0 0.0
    %648 = vmatpush.msra.mxu0 0.0
    %649 = vmatpush.msra.mxu0 0.0
    %650 = vmatpush.msra.mxu0 0.0
    %651 = vmatpush.msra.mxu0 0.0
    %652 = vmatpush.msra.mxu0 0.0
    %653 = vmatpush.msra.mxu0 0.0
    %654 = vmatpush.msra.mxu0 %v630
    %655 = vmatpush.msra.mxu0 %v629
    %656 = vmatpush.msra.mxu0 %v628
    %657 = vmatpush.msra.mxu0 %v627
    %658 = vmatmul.f32.gmra.mxu0 %v637
    %v659 = vpop.f32.mrf.mxu0
    %v660 = vadd.f32 %v634, %v659
    %661 = vmatmul.f32.gmra.mxu0 %v640
    %v662 = vpop.f32.mrf.mxu0
    %v663 = vadd.f32 %v634, %v662
    %664 = vdwg.mxu0
    %665 = vst [vmem:[#allocation2] sm:$0xff] %v660
    %666 = vst [vmem:[#allocation2 + $0x8] sm:$0xff] %v663
    %s667 = scalar_lea.vmem %s3, 32
    %v668 = vld [vmem:[%s667] sm:$0xff]
    %v669 = vld [vmem:[%s667 + $0x8] sm:$0xff]
    %v670 = vld [vmem:[%s667 + $0x10] sm:$0xff]
    %v671 = vld [vmem:[%s667 + $0x18] sm:$0xff]
    %s672 = scalar_lea.vmem %s5, 2
    %v673 = vld [vmem:[%s672] sm:$0x3]
    %s674 = scalar_lea.vmem %s6, 2
    %v675 = vld [vmem:[%s674] sm:$0x3]
    %v676 = vld [vmem:[#allocation2] sm:$0x3]
    %v678 = vsel %vm47, %v673, 0
    %680 = vmatpush.msra.mxu0 0.0
    %681 = vmatpush.msra.mxu0 0.0
    %682 = vmatpush.msra.mxu0 0.0
    %683 = vmatpush.msra.mxu0 0.0
    %684 = vmatpush.msra.mxu0 0.0
    %685 = vmatpush.msra.mxu0 0.0
    %686 = vmatpush.msra.mxu0 0.0
    %687 = vmatpush.msra.mxu0 0.0
    %688 = vmatpush.msra.mxu0 0.0
    %689 = vmatpush.msra.mxu0 0.0
    %690 = vmatpush.msra.mxu0 0.0
    %691 = vmatpush.msra.mxu0 0.0
    %692 = vmatpush.msra.mxu0 %v671
    %693 = vmatpush.msra.mxu0 %v670
    %694 = vmatpush.msra.mxu0 %v669
    %695 = vmatpush.msra.mxu0 %v668
    %696 = vmatmul.f32.gmra.mxu0 %v678
    %v697 = vpop.f32.mrf.mxu0
    %v698 = vadd.f32 0.0, %v697
    %699 = vdwg.mxu0
    %v700 = vadd.f32 %v676, %v698
    %v701 = vxor.u32 %v700, 2147483648
    %v702 = vmul.f32 %v701, 1.442695
    %v703 = vpow.pop %v702
    %v704 = vadd.f32 %v703, 1.0
    %v705 = vrcp.pop %v704
    %v706 = vmul.f32 %v704, %v705
    %v707 = vsub.f32 1.0, %v706
    %v708 = vmul.f32 %v705, %v707
    %v709 = vadd.f32 %v705, %v708
    %vm710 = vweird.f32 %v704
    %vm711 = vweird.f32 %v705
    %vm712 = vmor %vm710, %vm711
    %v713 = vsel %vm712, %v705, %v709
    %v714 = vand.u32 2147483647, %v704
    %vm715 = vcmp.eq.f32.partialorder %v714, 8.507059e+37
    %v716 = vand.u32 %v704, 2147483648
    %v717 = vor.u32 1.1754944e-38, %v716
    %v718 = vsel %vm715, %v717, %v713
    %v719 = vmul.f32 1.0, %v718
    %v720 = vtanh.pop %v700
    %722 = vrot.lane.b32.xlu0 %v675, 32
    %v723 = vpop.permute.xlu0 %722
    %v725 = vmul.f32 %v719, %v723
    %727 = vrot.lane.b32.xlu0 %v720, 64
    %v728 = vpop.permute.xlu0 %727
    %v730 = vmul.f32 %v719, %v728
    %732 = vrot.lane.b32.xlu0 %v730, 32
    %v733 = vpop.permute.xlu0 %732
    %v735 = vadd.f32 %v725, %v733
    %v736 = vtanh.pop %v735
    %738 = vrot.lane.b32.xlu0 %v736, 64
    %v739 = vpop.permute.xlu0 %738
    %v741 = vmul.f32 %v719, %v739
    %v742 = vld [vmem:[#allocation2 + $0x2] sm:$0x3]
    %744 = vrot.lane.b32.xlu0 %v741, 32
    %v745 = vpop.permute.xlu0 %744
    %v746 = vsel %vm47, %v745, 0
    %748 = vmatpush.msra.mxu0 0.0
    %749 = vmatpush.msra.mxu0 0.0
    %750 = vmatpush.msra.mxu0 0.0
    %751 = vmatpush.msra.mxu0 0.0
    %752 = vmatpush.msra.mxu0 0.0
    %753 = vmatpush.msra.mxu0 0.0
    %754 = vmatpush.msra.mxu0 0.0
    %755 = vmatpush.msra.mxu0 0.0
    %756 = vmatpush.msra.mxu0 0.0
    %757 = vmatpush.msra.mxu0 0.0
    %758 = vmatpush.msra.mxu0 0.0
    %759 = vmatpush.msra.mxu0 0.0
    %760 = vmatpush.msra.mxu0 %v671
    %761 = vmatpush.msra.mxu0 %v670
    %762 = vmatpush.msra.mxu0 %v669
    %763 = vmatpush.msra.mxu0 %v668
    %764 = vmatmul.f32.gmra.mxu0 %v746
    %v765 = vpop.f32.mrf.mxu0
    %v766 = vadd.f32 0.0, %v765
    %767 = vdwg.mxu0
    %v768 = vadd.f32 %v742, %v766
    %v769 = vxor.u32 %v768, 2147483648
    %v770 = vmul.f32 %v769, 1.442695
    %v771 = vpow.pop %v770
    %v772 = vadd.f32 %v771, 1.0
    %v773 = vrcp.pop %v772
    %v774 = vmul.f32 %v772, %v773
    %v775 = vsub.f32 1.0, %v774
    %v776 = vmul.f32 %v773, %v775
    %v777 = vadd.f32 %v773, %v776
    %vm778 = vweird.f32 %v772
    %vm779 = vweird.f32 %v773
    %vm780 = vmor %vm778, %vm779
    %v781 = vsel %vm780, %v773, %v777
    %v782 = vand.u32 2147483647, %v772
    %vm783 = vcmp.eq.f32.partialorder %v782, 8.507059e+37
    %v784 = vand.u32 %v772, 2147483648
    %v785 = vor.u32 1.1754944e-38, %v784
    %v786 = vsel %vm783, %v785, %v781
    %v787 = vmul.f32 1.0, %v786
    %v788 = vtanh.pop %v768
    %v789 = vmul.f32 %v787, %v735
    %791 = vrot.lane.b32.xlu0 %v788, 64
    %v792 = vpop.permute.xlu0 %791
    %v794 = vmul.f32 %v787, %v792
    %796 = vrot.lane.b32.xlu0 %v794, 32
    %v797 = vpop.permute.xlu0 %796
    %v799 = vadd.f32 %v789, %v797
    %v800 = vtanh.pop %v799
    %802 = vrot.lane.b32.xlu0 %v800, 64
    %v803 = vpop.permute.xlu0 %802
    %v805 = vmul.f32 %v787, %v803
    %v806 = vld [vmem:[#allocation2 + $0x4] sm:$0x3]
    %808 = vrot.lane.b32.xlu0 %v805, 32
    %v809 = vpop.permute.xlu0 %808
    %v810 = vsel %vm47, %v809, 0
    %812 = vmatpush.msra.mxu0 0.0
    %813 = vmatpush.msra.mxu0 0.0
    %814 = vmatpush.msra.mxu0 0.0
    %815 = vmatpush.msra.mxu0 0.0
    %816 = vmatpush.msra.mxu0 0.0
    %817 = vmatpush.msra.mxu0 0.0
    %818 = vmatpush.msra.mxu0 0.0
    %819 = vmatpush.msra.mxu0 0.0
    %820 = vmatpush.msra.mxu0 0.0
    %821 = vmatpush.msra.mxu0 0.0
    %822 = vmatpush.msra.mxu0 0.0
    %823 = vmatpush.msra.mxu0 0.0
    %824 = vmatpush.msra.mxu0 %v671
    %825 = vmatpush.msra.mxu0 %v670
    %826 = vmatpush.msra.mxu0 %v669
    %827 = vmatpush.msra.mxu0 %v668
    %828 = vmatmul.f32.gmra.mxu0 %v810
    %v829 = vpop.f32.mrf.mxu0
    %v830 = vadd.f32 0.0, %v829
    %831 = vdwg.mxu0
    %v832 = vadd.f32 %v806, %v830
    %v833 = vxor.u32 %v832, 2147483648
    %v834 = vmul.f32 %v833, 1.442695
    %v835 = vpow.pop %v834
    %v836 = vadd.f32 %v835, 1.0
    %v837 = vrcp.pop %v836
    %v838 = vmul.f32 %v836, %v837
    %v839 = vsub.f32 1.0, %v838
    %v840 = vmul.f32 %v837, %v839
    %v841 = vadd.f32 %v837, %v840
    %vm842 = vweird.f32 %v836
    %vm843 = vweird.f32 %v837
    %vm844 = vmor %vm842, %vm843
    %v845 = vsel %vm844, %v837, %v841
    %v846 = vand.u32 2147483647, %v836
    %vm847 = vcmp.eq.f32.partialorder %v846, 8.507059e+37
    %v848 = vand.u32 %v836, 2147483648
    %v849 = vor.u32 1.1754944e-38, %v848
    %v850 = vsel %vm847, %v849, %v845
    %v851 = vmul.f32 1.0, %v850
    %v852 = vtanh.pop %v832
    %v853 = vmul.f32 %v851, %v799
    %855 = vrot.lane.b32.xlu0 %v852, 64
    %v856 = vpop.permute.xlu0 %855
    %v858 = vmul.f32 %v851, %v856
    %860 = vrot.lane.b32.xlu0 %v858, 32
    %v861 = vpop.permute.xlu0 %860
    %v863 = vadd.f32 %v853, %v861
    %v864 = vtanh.pop %v863
    %866 = vrot.lane.b32.xlu0 %v864, 64
    %v867 = vpop.permute.xlu0 %866
    %v869 = vmul.f32 %v851, %v867
    %v870 = vld [vmem:[#allocation2 + $0x6] sm:$0x3]
    %872 = vrot.lane.b32.xlu0 %v869, 32
    %v873 = vpop.permute.xlu0 %872
    %v874 = vsel %vm47, %v873, 0
    %876 = vmatpush.msra.mxu0 0.0
    %877 = vmatpush.msra.mxu0 0.0
    %878 = vmatpush.msra.mxu0 0.0
    %879 = vmatpush.msra.mxu0 0.0
    %880 = vmatpush.msra.mxu0 0.0
    %881 = vmatpush.msra.mxu0 0.0
    %882 = vmatpush.msra.mxu0 0.0
    %883 = vmatpush.msra.mxu0 0.0
    %884 = vmatpush.msra.mxu0 0.0
    %885 = vmatpush.msra.mxu0 0.0
    %886 = vmatpush.msra.mxu0 0.0
    %887 = vmatpush.msra.mxu0 0.0
    %888 = vmatpush.msra.mxu0 %v671
    %889 = vmatpush.msra.mxu0 %v670
    %890 = vmatpush.msra.mxu0 %v669
    %891 = vmatpush.msra.mxu0 %v668
    %892 = vmatmul.f32.gmra.mxu0 %v874
    %v893 = vpop.f32.mrf.mxu0
    %v894 = vadd.f32 0.0, %v893
    %895 = vdwg.mxu0
    %v896 = vadd.f32 %v870, %v894
    %v897 = vxor.u32 %v896, 2147483648
    %v898 = vmul.f32 %v897, 1.442695
    %v899 = vpow.pop %v898
    %v900 = vadd.f32 %v899, 1.0
    %v901 = vrcp.pop %v900
    %v902 = vmul.f32 %v900, %v901
    %v903 = vsub.f32 1.0, %v902
    %v904 = vmul.f32 %v901, %v903
    %v905 = vadd.f32 %v901, %v904
    %vm906 = vweird.f32 %v900
    %vm907 = vweird.f32 %v901
    %vm908 = vmor %vm906, %vm907
    %v909 = vsel %vm908, %v901, %v905
    %v910 = vand.u32 2147483647, %v900
    %vm911 = vcmp.eq.f32.partialorder %v910, 8.507059e+37
    %v912 = vand.u32 %v900, 2147483648
    %v913 = vor.u32 1.1754944e-38, %v912
    %v914 = vsel %vm911, %v913, %v909
    %v915 = vmul.f32 1.0, %v914
    %v916 = vtanh.pop %v896
    %v917 = vmul.f32 %v915, %v863
    %919 = vrot.lane.b32.xlu0 %v916, 64
    %v920 = vpop.permute.xlu0 %919
    %v922 = vmul.f32 %v915, %v920
    %924 = vrot.lane.b32.xlu0 %v922, 32
    %v925 = vpop.permute.xlu0 %924
    %v927 = vadd.f32 %v917, %v925
    %v928 = vtanh.pop %v927
    %930 = vrot.lane.b32.xlu0 %v928, 64
    %v931 = vpop.permute.xlu0 %930
    %v933 = vmul.f32 %v915, %v931
    %v934 = vld [vmem:[#allocation2 + $0x8] sm:$0x3]
    %936 = vrot.lane.b32.xlu0 %v933, 32
    %v937 = vpop.permute.xlu0 %936
    %v938 = vsel %vm47, %v937, 0
    %940 = vmatpush.msra.mxu0 0.0
    %941 = vmatpush.msra.mxu0 0.0
    %942 = vmatpush.msra.mxu0 0.0
    %943 = vmatpush.msra.mxu0 0.0
    %944 = vmatpush.msra.mxu0 0.0
    %945 = vmatpush.msra.mxu0 0.0
    %946 = vmatpush.msra.mxu0 0.0
    %947 = vmatpush.msra.mxu0 0.0
    %948 = vmatpush.msra.mxu0 0.0
    %949 = vmatpush.msra.mxu0 0.0
    %950 = vmatpush.msra.mxu0 0.0
    %951 = vmatpush.msra.mxu0 0.0
    %952 = vmatpush.msra.mxu0 %v671
    %953 = vmatpush.msra.mxu0 %v670
    %954 = vmatpush.msra.mxu0 %v669
    %955 = vmatpush.msra.mxu0 %v668
    %956 = vmatmul.f32.gmra.mxu0 %v938
    %v957 = vpop.f32.mrf.mxu0
    %v958 = vadd.f32 0.0, %v957
    %959 = vdwg.mxu0
    %v960 = vadd.f32 %v934, %v958
    %v961 = vxor.u32 %v960, 2147483648
    %v962 = vmul.f32 %v961, 1.442695
    %v963 = vpow.pop %v962
    %v964 = vadd.f32 %v963, 1.0
    %v965 = vrcp.pop %v964
    %v966 = vmul.f32 %v964, %v965
    %v967 = vsub.f32 1.0, %v966
    %v968 = vmul.f32 %v965, %v967
    %v969 = vadd.f32 %v965, %v968
    %vm970 = vweird.f32 %v964
    %vm971 = vweird.f32 %v965
    %vm972 = vmor %vm970, %vm971
    %v973 = vsel %vm972, %v965, %v969
    %v974 = vand.u32 2147483647, %v964
    %vm975 = vcmp.eq.f32.partialorder %v974, 8.507059e+37
    %v976 = vand.u32 %v964, 2147483648
    %v977 = vor.u32 1.1754944e-38, %v976
    %v978 = vsel %vm975, %v977, %v973
    %v979 = vmul.f32 1.0, %v978
    %v980 = vtanh.pop %v960
    %v981 = vmul.f32 %v979, %v927
    %983 = vrot.lane.b32.xlu0 %v980, 64
    %v984 = vpop.permute.xlu0 %983
    %v986 = vmul.f32 %v979, %v984
    %988 = vrot.lane.b32.xlu0 %v986, 32
    %v989 = vpop.permute.xlu0 %988
    %v991 = vadd.f32 %v981, %v989
    %v992 = vtanh.pop %v991
    %994 = vrot.lane.b32.xlu0 %v992, 64
    %v995 = vpop.permute.xlu0 %994
    %v997 = vmul.f32 %v979, %v995
    %v998 = vld [vmem:[#allocation2 + $0xa] sm:$0x3]
    %1000 = vrot.lane.b32.xlu0 %v997, 32
    %v1001 = vpop.permute.xlu0 %1000
    %v1002 = vsel %vm47, %v1001, 0
    %1004 = vmatpush.msra.mxu0 0.0
    %1005 = vmatpush.msra.mxu0 0.0
    %1006 = vmatpush.msra.mxu0 0.0
    %1007 = vmatpush.msra.mxu0 0.0
    %1008 = vmatpush.msra.mxu0 0.0
    %1009 = vmatpush.msra.mxu0 0.0
    %1010 = vmatpush.msra.mxu0 0.0
    %1011 = vmatpush.msra.mxu0 0.0
    %1012 = vmatpush.msra.mxu0 0.0
    %1013 = vmatpush.msra.mxu0 0.0
    %1014 = vmatpush.msra.mxu0 0.0
    %1015 = vmatpush.msra.mxu0 0.0
    %1016 = vmatpush.msra.mxu0 %v671
    %1017 = vmatpush.msra.mxu0 %v670
    %1018 = vmatpush.msra.mxu0 %v669
    %1019 = vmatpush.msra.mxu0 %v668
    %1020 = vmatmul.f32.gmra.mxu0 %v1002
    %v1021 = vpop.f32.mrf.mxu0
    %v1022 = vadd.f32 0.0, %v1021
    %1023 = vdwg.mxu0
    %v1024 = vadd.f32 %v998, %v1022
    %v1025 = vxor.u32 %v1024, 2147483648
    %v1026 = vmul.f32 %v1025, 1.442695
    %v1027 = vpow.pop %v1026
    %v1028 = vadd.f32 %v1027, 1.0
    %v1029 = vrcp.pop %v1028
    %v1030 = vmul.f32 %v1028, %v1029
    %v1031 = vsub.f32 1.0, %v1030
    %v1032 = vmul.f32 %v1029, %v1031
    %v1033 = vadd.f32 %v1029, %v1032
    %vm1034 = vweird.f32 %v1028
    %vm1035 = vweird.f32 %v1029
    %vm1036 = vmor %vm1034, %vm1035
    %v1037 = vsel %vm1036, %v1029, %v1033
    %v1038 = vand.u32 2147483647, %v1028
    %vm1039 = vcmp.eq.f32.partialorder %v1038, 8.507059e+37
    %v1040 = vand.u32 %v1028, 2147483648
    %v1041 = vor.u32 1.1754944e-38, %v1040
    %v1042 = vsel %vm1039, %v1041, %v1037
    %v1043 = vmul.f32 1.0, %v1042
    %v1044 = vtanh.pop %v1024
    %v1045 = vmul.f32 %v1043, %v991
    %1047 = vrot.lane.b32.xlu0 %v1044, 64
    %v1048 = vpop.permute.xlu0 %1047
    %v1050 = vmul.f32 %v1043, %v1048
    %1052 = vrot.lane.b32.xlu0 %v1050, 32
    %v1053 = vpop.permute.xlu0 %1052
    %v1055 = vadd.f32 %v1045, %v1053
    %v1056 = vtanh.pop %v1055
    %1058 = vrot.lane.b32.xlu0 %v1056, 64
    %v1059 = vpop.permute.xlu0 %1058
    %v1061 = vmul.f32 %v1043, %v1059
    %v1062 = vld [vmem:[#allocation2 + $0xc] sm:$0x3]
    %1064 = vrot.lane.b32.xlu0 %v1061, 32
    %v1065 = vpop.permute.xlu0 %1064
    %v1066 = vsel %vm47, %v1065, 0
    %1068 = vmatpush.msra.mxu0 0.0
    %1069 = vmatpush.msra.mxu0 0.0
    %1070 = vmatpush.msra.mxu0 0.0
    %1071 = vmatpush.msra.mxu0 0.0
    %1072 = vmatpush.msra.mxu0 0.0
    %1073 = vmatpush.msra.mxu0 0.0
    %1074 = vmatpush.msra.mxu0 0.0
    %1075 = vmatpush.msra.mxu0 0.0
    %1076 = vmatpush.msra.mxu0 0.0
    %1077 = vmatpush.msra.mxu0 0.0
    %1078 = vmatpush.msra.mxu0 0.0
    %1079 = vmatpush.msra.mxu0 0.0
    %1080 = vmatpush.msra.mxu0 %v671
    %1081 = vmatpush.msra.mxu0 %v670
    %1082 = vmatpush.msra.mxu0 %v669
    %1083 = vmatpush.msra.mxu0 %v668
    %1084 = vmatmul.f32.gmra.mxu0 %v1066
    %v1085 = vpop.f32.mrf.mxu0
    %v1086 = vadd.f32 0.0, %v1085
    %1087 = vdwg.mxu0
    %v1088 = vadd.f32 %v1062, %v1086
    %v1089 = vxor.u32 %v1088, 2147483648
    %v1090 = vmul.f32 %v1089, 1.442695
    %v1091 = vpow.pop %v1090
    %v1092 = vadd.f32 %v1091, 1.0
    %v1093 = vrcp.pop %v1092
    %v1094 = vmul.f32 %v1092, %v1093
    %v1095 = vsub.f32 1.0, %v1094
    %v1096 = vmul.f32 %v1093, %v1095
    %v1097 = vadd.f32 %v1093, %v1096
    %vm1098 = vweird.f32 %v1092
    %vm1099 = vweird.f32 %v1093
    %vm1100 = vmor %vm1098, %vm1099
    %v1101 = vsel %vm1100, %v1093, %v1097
    %v1102 = vand.u32 2147483647, %v1092
    %vm1103 = vcmp.eq.f32.partialorder %v1102, 8.507059e+37
    %v1104 = vand.u32 %v1092, 2147483648
    %v1105 = vor.u32 1.1754944e-38, %v1104
    %v1106 = vsel %vm1103, %v1105, %v1101
    %v1107 = vmul.f32 1.0, %v1106
    %v1108 = vtanh.pop %v1088
    %v1109 = vmul.f32 %v1107, %v1055
    %1111 = vrot.lane.b32.xlu0 %v1108, 64
    %v1112 = vpop.permute.xlu0 %1111
    %v1114 = vmul.f32 %v1107, %v1112
    %1116 = vrot.lane.b32.xlu0 %v1114, 32
    %v1117 = vpop.permute.xlu0 %1116
    %v1119 = vadd.f32 %v1109, %v1117
    %v1120 = vtanh.pop %v1119
    %1122 = vrot.lane.b32.xlu0 %v1120, 64
    %v1123 = vpop.permute.xlu0 %1122
    %v1125 = vmul.f32 %v1107, %v1123
    %v1126 = vld [vmem:[#allocation2 + $0xe] sm:$0x3]
    %1128 = vrot.lane.b32.xlu0 %v1125, 32
    %v1129 = vpop.permute.xlu0 %1128
    %v1130 = vsel %vm47, %v1129, 0
    %1132 = vmatpush.msra.mxu0 0.0
    %1133 = vmatpush.msra.mxu0 0.0
    %1134 = vmatpush.msra.mxu0 0.0
    %1135 = vmatpush.msra.mxu0 0.0
    %1136 = vmatpush.msra.mxu0 0.0
    %1137 = vmatpush.msra.mxu0 0.0
    %1138 = vmatpush.msra.mxu0 0.0
    %1139 = vmatpush.msra.mxu0 0.0
    %1140 = vmatpush.msra.mxu0 0.0
    %1141 = vmatpush.msra.mxu0 0.0
    %1142 = vmatpush.msra.mxu0 0.0
    %1143 = vmatpush.msra.mxu0 0.0
    %1144 = vmatpush.msra.mxu0 %v671
    %1145 = vmatpush.msra.mxu0 %v670
    %1146 = vmatpush.msra.mxu0 %v669
    %1147 = vmatpush.msra.mxu0 %v668
    %1148 = vmatmul.f32.gmra.mxu0 %v1130
    %v1149 = vpop.f32.mrf.mxu0
    %v1150 = vadd.f32 0.0, %v1149
    %1151 = vdwg.mxu0
    %v1152 = vadd.f32 %v1126, %v1150
    %v1153 = vxor.u32 %v1152, 2147483648
    %v1154 = vmul.f32 %v1153, 1.442695
    %v1155 = vpow.pop %v1154
    %v1156 = vadd.f32 %v1155, 1.0
    %v1157 = vrcp.pop %v1156
    %v1158 = vmul.f32 %v1156, %v1157
    %v1159 = vsub.f32 1.0, %v1158
    %v1160 = vmul.f32 %v1157, %v1159
    %v1161 = vadd.f32 %v1157, %v1160
    %vm1162 = vweird.f32 %v1156
    %vm1163 = vweird.f32 %v1157
    %vm1164 = vmor %vm1162, %vm1163
    %v1165 = vsel %vm1164, %v1157, %v1161
    %v1166 = vand.u32 2147483647, %v1156
    %vm1167 = vcmp.eq.f32.partialorder %v1166, 8.507059e+37
    %v1168 = vand.u32 %v1156, 2147483648
    %v1169 = vor.u32 1.1754944e-38, %v1168
    %v1170 = vsel %vm1167, %v1169, %v1165
    %v1171 = vmul.f32 1.0, %v1170
    %v1172 = vtanh.pop %v1152
    %v1173 = vmul.f32 %v1171, %v1119
    %1175 = vrot.lane.b32.xlu0 %v1172, 64
    %v1176 = vpop.permute.xlu0 %1175
    %v1178 = vmul.f32 %v1171, %v1176
    %1180 = vrot.lane.b32.xlu0 %v1178, 32
    %v1181 = vpop.permute.xlu0 %1180
    %v1183 = vadd.f32 %v1173, %v1181
    %v1184 = vtanh.pop %v1183
    %1186 = vrot.lane.b32.xlu0 %v1184, 64
    %v1187 = vpop.permute.xlu0 %1186
    %v1189 = vmul.f32 %v1171, %v1187
    %1191 = vrot.lane.b32.xlu0 %v1189, 32
    %v1192 = vpop.permute.xlu0 %1191
    %s1194 = scalar_lea.vmem [#allocation6], 2
    %1195 = vst.msk [vmem:[%s1194] sm:$0x3] %vm155, %v1192
    %1197 = vrot.lane.b32.xlu0 %v1183, 96
    %v1198 = vpop.permute.xlu0 %1197
    %s1200 = scalar_lea.vmem [#allocation8], 2
    %1201 = vst.msk [vmem:[%s1200] sm:$0x3] %vm155, %v1198
    %v1202 = vld [vmem:[%s7] sm:$0xff]
    %v1203 = vld [vmem:[%s7 + $0x8] sm:$0xff]
    %v1204 = vld [vmem:[%s7 + $0x10] sm:$0xff]
    %v1205 = vld [vmem:[%s7 + $0x18] sm:$0xff]
    %v1206 = vld [vmem:[%s8] sm:$0x1]
    %v1208 = vperm.slane %v1206, 0
    %v1210 = vsel %vm47, %v1192, 0
    %1212 = vmatpush.msra.mxu0 0.0
    %1213 = vmatpush.msra.mxu0 0.0
    %1214 = vmatpush.msra.mxu0 0.0
    %1215 = vmatpush.msra.mxu0 0.0
    %1216 = vmatpush.msra.mxu0 0.0
    %1217 = vmatpush.msra.mxu0 0.0
    %1218 = vmatpush.msra.mxu0 0.0
    %1219 = vmatpush.msra.mxu0 0.0
    %1220 = vmatpush.msra.mxu0 0.0
    %1221 = vmatpush.msra.mxu0 0.0
    %1222 = vmatpush.msra.mxu0 0.0
    %1223 = vmatpush.msra.mxu0 0.0
    %1224 = vmatpush.msra.mxu0 %v1205
    %1225 = vmatpush.msra.mxu0 %v1204
    %1226 = vmatpush.msra.mxu0 %v1203
    %1227 = vmatpush.msra.mxu0 %v1202
    %1228 = vmatmul.f32.gmra.mxu0 %v1210
    %v1229 = vpop.f32.mrf.mxu0
    %v1230 = vadd.f32 %v1208, %v1229
    %1231 = vdwg.mxu0
    %1232 = vst [vmem:[#allocation4] sm:$0x3] %v1230
    // Predicated region
    $region38: #{rnn_forward.1} parent=1 // pred_check
      _
    $region39: #{rnn_forward.1} parent=1 // pred_check_branch
      %1234 = sbr.rel (0) target = $region41
    $region40: #{rnn_forward.1} parent=1 // pred_region
      %1236 = vsyncadd [#allocation5], 0
      %s1238 = sshll.u32 [#allocation4], 4
      %s1239 = int_to_ptr.vmem [resolvable:$true] %s1238
      %s1240 = sshll.u32 %s9, 4
      %s1241 = int_to_ptr.hbm [resolvable:$true] %s1240
      %1243 = dma.vmem_to_hbm [thread:$0]  %s1239, 32, %s1241, [#allocation5]
    $region41: #{rnn_forward.1} parent=1 // pred_fallthru
      _
    // Predicated region
    $region42: #{rnn_forward.1} parent=1 // pred_check
      _
    $region43: #{rnn_forward.1} parent=1 // pred_check_branch
      %1245 = sbr.rel (0) target = $region45
    $region44: #{rnn_forward.1} parent=1 // pred_region
      %1247 = vsyncadd [#allocation7], 0
      %s1248 = sshll.u32 [#allocation6], 4
      %s1249 = int_to_ptr.vmem [resolvable:$true] %s1248
      %s1250 = sshll.u32 %s10, 4
      %s1251 = int_to_ptr.hbm [resolvable:$true] %s1250
      %1256 = dma.vmem_to_hbm [thread:$0]  %s1249, 64, %s1251, [#allocation7], 32, 32, 2
    $region45: #{rnn_forward.1} parent=1 // pred_fallthru
      _
    // Predicated region
    $region46: #{rnn_forward.1} parent=1 // pred_check
      _
    $region47: #{rnn_forward.1} parent=1 // pred_check_branch
      %1258 = sbr.rel (0) target = $region49
    $region48: #{rnn_forward.1} parent=1 // pred_region
      %1260 = vsyncadd [#allocation7], 0
      %s1261 = sshll.u32 [#allocation8], 4
      %s1262 = int_to_ptr.vmem [resolvable:$true] %s1261
      %s1263 = sshll.u32 %s11, 4
      %s1264 = int_to_ptr.hbm [resolvable:$true] %s1263
      %1269 = dma.vmem_to_hbm [thread:$0]  %s1262, 64, %s1264, [#allocation7], 32, 32, 2
    $region49: #{rnn_forward.1} parent=1 // pred_fallthru
      _
    // Predicated region
    $region50: #{rnn_forward.1} parent=1 // pred_check
      _
    $region51: #{rnn_forward.1} parent=1 // pred_check_branch
      %1271 = sbr.rel (0) target = $region53
    $region52: #{rnn_forward.1} parent=1 // pred_region
      %1273 = dma.done [#allocation5], 32
    $region53: #{rnn_forward.1} parent=1 // pred_fallthru
      _
    // Predicated region
    $region54: #{rnn_forward.1} parent=1 // pred_check
      _
    $region55: #{rnn_forward.1} parent=1 // pred_check_branch
      %1275 = sbr.rel (0) target = $region57
    $region56: #{rnn_forward.1} parent=1 // pred_region
      %1277 = dma.done [#allocation7], 64
    $region57: #{rnn_forward.1} parent=1 // pred_fallthru
      _
    // Predicated region
    $region58: #{rnn_forward.1} parent=1 // pred_check
      _
    $region59: #{rnn_forward.1} parent=1 // pred_check_branch
      %1279 = sbr.rel (0) target = $region61
    $region60: #{rnn_forward.1} parent=1 // pred_region
      %1281 = dma.done [#allocation7], 64
    $region61: #{rnn_forward.1} parent=1 // pred_fallthru
      _
    %1282 = vsyncpa [#allocation5], 1
    %1283 = vsyncpa [#allocation7], 1

</llo_original>
